<compile_context>
chip_gen: v5e
topology: v5e:2x2
jax: 0.10.0
libtpu: 0.0.40
codegen_flags: <defaults>
</compile_context>

<pallas_src>
import functools
import math

import jax
import jax.numpy as jnp
from jax import lax
from jax.experimental import pallas as pl
from jax.experimental.pallas import tpu as pltpu


# ------------------------------- kernel --------------------------------------

def _layernorm(t, g, b, eps=1e-5):
    # fused single-pass statistics: E[x] and E[x^2] -> mean/var
    mu = jnp.mean(t, axis=-1, keepdims=True)
    ms = jnp.mean(t * t, axis=-1, keepdims=True)
    var = ms - mu * mu
    return (t - mu) * lax.rsqrt(var + eps) * g + b


def _transformer_layer_kernel(x_ref, mask_ref,
                              ln1g_ref, ln1b_ref, wqkv_ref, wout_ref,
                              ln2g_ref, ln2b_ref, w1_ref, b1_ref, w2_ref, b2_ref,
                              o_ref, *, heads):
    """Grid = (batch, depth). One invocation = one (batch block, layer)."""
    l = pl.program_id(1)

    # Residual stream lives in the VMEM-resident output block (constant index
    # across the depth axis); initialize it from x on the first layer.
    @pl.when(l == 0)
    def _():
        o_ref[...] = x_ref[...]

    N, D = o_ref.shape[1], o_ref.shape[2]
    inner = wout_ref.shape[1]
    dh = inner // heads
    cd = wqkv_ref.dtype            # matmul-input dtype (bf16 or f32); acc is f32
    inv_sqrt2 = 1.0 / math.sqrt(2.0)

    x = o_ref[0]                   # (N, D) f32 residual stream
    mask = mask_ref[0]             # (N, N) f32 additive mask (broadcast over heads)

    # ------------------------------ Attention --------------------------------
    xn = _layernorm(x, ln1g_ref[0], ln1b_ref[0])
    # single fused, lane-dense QKV matmul; softmax scale pre-folded into q cols
    qkv = jnp.dot(xn.astype(cd), wqkv_ref[0],
                  preferred_element_type=jnp.float32)            # (N, 3*inner)
    q = qkv[:, :inner]
    k = qkv[:, inner:2 * inner]
    v = qkv[:, 2 * inner:]

    def to_heads(t):               # (N, inner) -> (H, N, dh)
        return jnp.transpose(t.reshape(N, heads, dh), (1, 0, 2))

    qh = to_heads(q).astype(cd)
    kh = to_heads(k).astype(cd)
    vh = to_heads(v).astype(cd)

    # TODO(synk): at real ViT sequence lengths, tile kv blocks with an online
    # (flash-style) softmax instead of materializing the (H, N, N) scores.
    dots = jnp.einsum('hnd,hmd->hnm', qh, kh,
                      preferred_element_type=jnp.float32) + mask[None]   # (H,N,N)
    m = jnp.max(dots, axis=-1, keepdims=True)
    e = jnp.exp(dots - m)
    s = jnp.sum(e, axis=-1, keepdims=True)
    r = pl.reciprocal(s, approx=True)          # EUP slot
    r = r * (2.0 - s * r)                      # one Newton step -> ~f32 accuracy
    attn = e * r

    ctx = jnp.einsum('hnm,hmd->hnd', attn.astype(cd), vh,
                     preferred_element_type=jnp.float32)         # (H, N, dh)
    # head-collapse relayout (XLU), then ONE K=inner output projection matmul
    ctx = jnp.transpose(ctx, (1, 0, 2)).reshape(N, inner)        # (N, inner)
    y = jnp.dot(ctx.astype(cd), wout_ref[0],
                preferred_element_type=jnp.float32)              # (N, D)
    x = x + y

    # ----------------------------- FeedForward -------------------------------
    xn = _layernorm(x, ln2g_ref[0], ln2b_ref[0])
    h = jnp.dot(xn.astype(cd), w1_ref[0],
                preferred_element_type=jnp.float32) + b1_ref[0]
    # exact erf GELU -- matches torch.nn.GELU default
    h = 0.5 * h * (1.0 + lax.erf(h * inv_sqrt2))
    y = jnp.dot(h.astype(cd), w2_ref[0],
                preferred_element_type=jnp.float32) + b2_ref[0]
    x = x + y

    o_ref[0] = x


# ------------------------- parameter packing (wrapper) ------------------------

def _pack_params(params, *, dim, heads, dim_head, mlp_dim, weight_dtype):
    """Stack per-layer params along depth; fold the softmax scale into the q
    columns of the fused QKV weight; store matmul weights in `weight_dtype`."""
    depth = len(params)
    inner = heads * dim_head
    scale = dim_head ** (-0.5)

    ln1g = jnp.stack([a["ln_g"] for a, _ in params]).reshape(depth, 1, dim)
    ln1b = jnp.stack([a["ln_b"] for a, _ in params]).reshape(depth, 1, dim)

    wqkv = jnp.stack([a["w_qkv"] for a, _ in params])            # (depth, D, 3*inner)
    col_scale = jnp.concatenate([jnp.full((inner,), scale, jnp.float32),
                                 jnp.ones((2 * inner,), jnp.float32)])
    wqkv = (wqkv * col_scale).astype(weight_dtype)               # fold 1/sqrt(dh) into q

    wout = jnp.stack([a["w_out"] for a, _ in params]).astype(weight_dtype)  # (depth, inner, D)

    ln2g = jnp.stack([f["ln_g"] for _, f in params]).reshape(depth, 1, dim)
    ln2b = jnp.stack([f["ln_b"] for _, f in params]).reshape(depth, 1, dim)
    w1 = jnp.stack([f["w1"] for _, f in params]).astype(weight_dtype)       # (depth, D, mlp)
    b1 = jnp.stack([f["b1"] for _, f in params]).reshape(depth, 1, mlp_dim)
    w2 = jnp.stack([f["w2"] for _, f in params]).astype(weight_dtype)       # (depth, mlp, D)
    b2 = jnp.stack([f["b2"] for _, f in params]).reshape(depth, 1, dim)

    return (ln1g, ln1b, wqkv, wout, ln2g, ln2b, w1, b1, w2, b2)


def transformer_forward(x, mask, params, *, heads, dim_head, mlp_dim,
                        weight_dtype=jnp.bfloat16):
    """x: [B, N, D] f32, mask: [B, N, N] f32 (additive, broadcast over heads)."""
    B, N, D = x.shape
    depth = len(params)
    inner = heads * dim_head
    packed = _pack_params(params, dim=D, heads=heads, dim_head=dim_head,
                          mlp_dim=mlp_dim, weight_dtype=weight_dtype)

    # One layer's slice of each stacked parameter is streamed per depth grid
    # step (double-buffered by the Pallas pipeline behind the current layer's
    # compute). TODO(synk): at real ViT dims additionally tile wqkv/w1/w2 over
    # a reduction grid axis (256-multiple tiles on v6e/v7x, 128 on v5e).
    def layer_spec(a):
        nd = a.ndim
        return pl.BlockSpec((1,) + a.shape[1:], lambda b, l, _nd=nd: (l,) + (0,) * (_nd - 1))

    in_specs = [
        pl.BlockSpec((1, N, D), lambda b, l: (b, 0, 0)),   # x (read only at l == 0)
        pl.BlockSpec((1, N, N), lambda b, l: (b, 0, 0)),   # additive mask
    ] + [layer_spec(a) for a in packed]

    # VMEM budget: 2x (double-buffered) streamed layer weights + small vectors
    # + activation blocks, with generous padding headroom; capped for v7x.
    w_isz = jnp.dtype(weight_dtype).itemsize
    per_layer_w = (D * 3 * inner + inner * D + 2 * D * mlp_dim) * w_isz
    per_layer_vec = (5 * D + mlp_dim) * 4
    act = (2 * N * D + N * N) * 4
    vmem_limit = 4 * (2 * per_layer_w + 8 * per_layer_vec + 2 * act) + (4 << 20)
    vmem_limit = int(max(16 << 20, min(vmem_limit, 64 << 20)))

    kernel = functools.partial(_transformer_layer_kernel, heads=heads)
    return pl.pallas_call(
        kernel,
        out_shape=jax.ShapeDtypeStruct((B, N, D), x.dtype),
        grid=(B, depth),
        in_specs=in_specs,
        # constant block index across the depth axis -> residual stream stays
        # resident in VMEM for the whole network; HBM writeback once per batch block
        out_specs=pl.BlockSpec((1, N, D), lambda b, l: (b, 0, 0)),
        compiler_params=pltpu.CompilerParams(
            dimension_semantics=("parallel", "arbitrary"),
            vmem_limit_bytes=vmem_limit),
    )(x, mask, *packed)


# ------------------------------ param init -----------------------------------

def init_transformer_params(key, *, dim, depth, heads, dim_head, mlp_dim):
    inner = heads * dim_head
    params = []
    for _ in range(depth):
        key, k1, k2, k3, k4 = jax.random.split(key, 5)
        attn_p = {
            "ln_g": jnp.ones((dim,), jnp.float32),
            "ln_b": jnp.zeros((dim,), jnp.float32),
            "w_qkv": (jax.random.normal(k1, (dim, 3 * inner), jnp.float32)
                      * (1.0 / math.sqrt(dim))),
            "w_out": (jax.random.normal(k2, (inner, dim), jnp.float32)
                      * (1.0 / math.sqrt(inner))),
        }
        ff_p = {
            "ln_g": jnp.ones((dim,), jnp.float32),
            "ln_b": jnp.zeros((dim,), jnp.float32),
            "w1": (jax.random.normal(k3, (dim, mlp_dim), jnp.float32)
                   * (1.0 / math.sqrt(dim))),
            "b1": jnp.zeros((mlp_dim,), jnp.float32),
            "w2": (jax.random.normal(k4, (mlp_dim, dim), jnp.float32)
                   * (1.0 / math.sqrt(mlp_dim))),
            "b2": jnp.zeros((dim,), jnp.float32),
        }
        params.append((attn_p, ff_p))
    return params


# --------------------------- pure-JAX reference -------------------------------

def _ref_forward(x, mask, params, *, heads):
    def ln(t, g, b):
        mu = jnp.mean(t, axis=-1, keepdims=True)
        var = jnp.mean((t - mu) ** 2, axis=-1, keepdims=True)
        return (t - mu) * lax.rsqrt(var + 1e-5) * g + b

    B, N, _ = x.shape
    for attn_p, ff_p in params:
        inner = attn_p["w_out"].shape[0]
        dh = inner // heads
        xn = ln(x, attn_p["ln_g"], attn_p["ln_b"])
        qkv = xn @ attn_p["w_qkv"]
        q, k, v = jnp.split(qkv, 3, axis=-1)

        def to_h(t):
            return jnp.transpose(t.reshape(B, N, heads, dh), (0, 2, 1, 3))

        q, k, v = map(to_h, (q, k, v))
        dots = jnp.einsum("bhnd,bhmd->bhnm", q, k) * (dh ** -0.5) + mask[:, None]
        attn = jax.nn.softmax(dots, axis=-1)
        out = jnp.einsum("bhnm,bhmd->bhnd", attn, v)
        out = jnp.transpose(out, (0, 2, 1, 3)).reshape(B, N, inner)
        x = out @ attn_p["w_out"] + x

        xn = ln(x, ff_p["ln_g"], ff_p["ln_b"])
        h = xn @ ff_p["w1"] + ff_p["b1"]
        h = 0.5 * h * (1.0 + lax.erf(h / math.sqrt(2.0)))
        x = h @ ff_p["w2"] + ff_p["b2"] + x
    return x


# ----------------------------------- main -------------------------------------

DIM, DEPTH, HEADS, DIM_HEAD, MLP_DIM = 32, 2, 4, 8, 64
B, N = 2, 8

if __name__ == "__main__":
    key = jax.random.PRNGKey(0)
    kx, km, kp = jax.random.split(key, 3)

    x = jax.random.normal(kx, (B, N, DIM), jnp.float32)
    mask = 0.1 * jax.random.normal(km, (B, N, N), jnp.float32)

    params = init_transformer_params(
        kp, dim=DIM, depth=DEPTH, heads=HEADS, dim_head=DIM_HEAD, mlp_dim=MLP_DIM)

    ref = _ref_forward(x, mask, params, heads=HEADS)

    # exact-semantics path (f32 matmul inputs) -- tight tolerance vs reference
    out_f32 = jax.block_until_ready(
        transformer_forward(x, mask, params, heads=HEADS, dim_head=DIM_HEAD,
                            mlp_dim=MLP_DIM, weight_dtype=jnp.float32))
    assert out_f32.shape == (B, N, DIM)
    assert jnp.allclose(out_f32, ref, atol=1e-4, rtol=1e-4), "f32 mismatch vs reference"

    # performance path (bf16 matmul inputs, f32 accumulation/LN/softmax)
    out_bf16 = jax.block_until_ready(
        transformer_forward(x, mask, params, heads=HEADS, dim_head=DIM_HEAD,
                            mlp_dim=MLP_DIM, weight_dtype=jnp.bfloat16))
    assert jnp.allclose(out_bf16, ref, atol=5e-2, rtol=5e-2), "bf16 mismatch vs reference"

    print("KERNEL_OK")
</pallas_src>

<mosaic_0001>
module attributes {stable_mosaic.version = 11 : i64} {
  func.func @_transformer_layer_kernel(%arg0: i32, %arg1: i32, %arg2: memref<1x8x32xf32, #tpu.memory_space<vmem>>, %arg3: memref<1x8x8xf32, #tpu.memory_space<vmem>>, %arg4: memref<1x1x32xf32, #tpu.memory_space<vmem>>, %arg5: memref<1x1x32xf32, #tpu.memory_space<vmem>>, %arg6: memref<1x32x96xf32, #tpu.memory_space<vmem>>, %arg7: memref<1x32x32xf32, #tpu.memory_space<vmem>>, %arg8: memref<1x1x32xf32, #tpu.memory_space<vmem>>, %arg9: memref<1x1x32xf32, #tpu.memory_space<vmem>>, %arg10: memref<1x32x64xf32, #tpu.memory_space<vmem>>, %arg11: memref<1x1x64xf32, #tpu.memory_space<vmem>>, %arg12: memref<1x64x32xf32, #tpu.memory_space<vmem>>, %arg13: memref<1x1x32xf32, #tpu.memory_space<vmem>>, %arg14: memref<1x8x32xf32, #tpu.memory_space<vmem>>) attributes {dimension_semantics = [#tpu.dimension_semantics<parallel>, #tpu.dimension_semantics<arbitrary>], iteration_bounds = array<i64: 2, 2>, scalar_prefetch = 0 : i64, scratch_operands = 0 : i64, tpu.core_type = #tpu.core_type<tc>, window_params = [{transform_indices = @transform_0, window_bounds = array<i64: 1, 8, 32>}, {transform_indices = @transform_1, window_bounds = array<i64: 1, 8, 8>}, {transform_indices = @transform_2, window_bounds = array<i64: 1, 1, 32>}, {transform_indices = @transform_3, window_bounds = array<i64: 1, 1, 32>}, {transform_indices = @transform_4, window_bounds = array<i64: 1, 32, 96>}, {transform_indices = @transform_5, window_bounds = array<i64: 1, 32, 32>}, {transform_indices = @transform_6, window_bounds = array<i64: 1, 1, 32>}, {transform_indices = @transform_7, window_bounds = array<i64: 1, 1, 32>}, {transform_indices = @transform_8, window_bounds = array<i64: 1, 32, 64>}, {transform_indices = @transform_9, window_bounds = array<i64: 1, 1, 64>}, {transform_indices = @transform_10, window_bounds = array<i64: 1, 64, 32>}, {transform_indices = @transform_11, window_bounds = array<i64: 1, 1, 32>}, {transform_indices = @transform_12, window_bounds = array<i64: 1, 8, 32>}]} {
    %c0_i32 = arith.constant 0 : i32
    %0 = arith.cmpi eq, %arg1, %c0_i32 : i32
    %1 = arith.extui %0 : i1 to i32
    %c0_i32_0 = arith.constant 0 : i32
    %2 = arith.cmpi ne, %1, %c0_i32_0 : i32
    scf.if %2 {
      %c0_60 = arith.constant 0 : index
      %c0_61 = arith.constant 0 : index
      %c0_62 = arith.constant 0 : index
      %122 = vector.load %arg2[%c0_60, %c0_61, %c0_62] : memref<1x8x32xf32, #tpu.memory_space<vmem>>, vector<1x8x32xf32>
      %c0_63 = arith.constant 0 : index
      %c0_64 = arith.constant 0 : index
      %c0_65 = arith.constant 0 : index
      %123 = vector.load %arg14[%c0_63, %c0_64, %c0_65] : memref<1x8x32xf32, #tpu.memory_space<vmem>>, vector<1x8x32xf32>
      tpu.vector_store %arg14[%c0_63, %c0_64, %c0_65], %122 {strides = array<i32>} : memref<1x8x32xf32, #tpu.memory_space<vmem>>, vector<1x8x32xf32>,
    } else {
    }
    %c0 = arith.constant 0 : index
    %c0_1 = arith.constant 0 : index
    %c0_2 = arith.constant 0 : index
    %3 = vector.load %arg14[%c0, %c0_1, %c0_2] : memref<1x8x32xf32, #tpu.memory_space<vmem>>, vector<1x8x32xf32>
    %4 = vector.shape_cast %3 : vector<1x8x32xf32> to vector<8x32xf32>
    %c0_3 = arith.constant 0 : index
    %c0_4 = arith.constant 0 : index
    %c0_5 = arith.constant 0 : index
    %5 = vector.load %arg3[%c0_3, %c0_4, %c0_5] : memref<1x8x8xf32, #tpu.memory_space<vmem>>, vector<1x8x8xf32>
    %6 = vector.shape_cast %5 : vector<1x8x8xf32> to vector<8x8xf32>
    %c0_6 = arith.constant 0 : index
    %c0_7 = arith.constant 0 : index
    %c0_8 = arith.constant 0 : index
    %7 = vector.load %arg4[%c0_6, %c0_7, %c0_8] : memref<1x1x32xf32, #tpu.memory_space<vmem>>, vector<1x1x32xf32>
    %8 = vector.shape_cast %7 : vector<1x1x32xf32> to vector<1x32xf32>
    %c0_9 = arith.constant 0 : index
    %c0_10 = arith.constant 0 : index
    %c0_11 = arith.constant 0 : index
    %9 = vector.load %arg5[%c0_9, %c0_10, %c0_11] : memref<1x1x32xf32, #tpu.memory_space<vmem>>, vector<1x1x32xf32>
    %10 = vector.shape_cast %9 : vector<1x1x32xf32> to vector<1x32xf32>
    %cst = arith.constant dense<0.000000e+00> : vector<8xf32>
    %11 = vector.multi_reduction <add>, %4, %cst [1] : vector<8x32xf32> to vector<8xf32>
    %12 = vector.shape_cast %11 : vector<8xf32> to vector<8x1xf32>
    %cst_12 = arith.constant 3.200000e+01 : f32
    %13 = vector.broadcast %cst_12 : f32 to vector<8x1xf32>
    %14 = arith.divf %12, %13 : vector<8x1xf32>
    %15 = arith.mulf %4, %4 : vector<8x32xf32>
    %cst_13 = arith.constant dense<0.000000e+00> : vector<8xf32>
    %16 = vector.multi_reduction <add>, %15, %cst_13 [1] : vector<8x32xf32> to vector<8xf32>
    %17 = vector.shape_cast %16 : vector<8xf32> to vector<8x1xf32>
    %cst_14 = arith.constant 3.200000e+01 : f32
    %18 = vector.broadcast %cst_14 : f32 to vector<8x1xf32>
    %19 = arith.divf %17, %18 : vector<8x1xf32>
    %20 = arith.mulf %14, %14 : vector<8x1xf32>
    %21 = arith.subf %19, %20 : vector<8x1xf32>
    %22 = vector.broadcast %14 : vector<8x1xf32> to vector<8x32xf32>
    %23 = arith.subf %4, %22 : vector<8x32xf32>
    %cst_15 = arith.constant 9.99999974E-6 : f32
    %24 = vector.broadcast %cst_15 : f32 to vector<8x1xf32>
    %25 = arith.addf %21, %24 : vector<8x1xf32>
    %26 = math.rsqrt %25 : vector<8x1xf32>
    %27 = vector.broadcast %26 : vector<8x1xf32> to vector<8x32xf32>
    %28 = arith.mulf %23, %27 : vector<8x32xf32>
    %29 = vector.broadcast %8 : vector<1x32xf32> to vector<8x32xf32>
    %30 = arith.mulf %28, %29 : vector<8x32xf32>
    %31 = vector.broadcast %10 : vector<1x32xf32> to vector<8x32xf32>
    %32 = arith.addf %30, %31 : vector<8x32xf32>
    %c0_16 = arith.constant 0 : index
    %c0_17 = arith.constant 0 : index
    %c0_18 = arith.constant 0 : index
    %33 = vector.load %arg6[%c0_16, %c0_17, %c0_18] : memref<1x32x96xf32, #tpu.memory_space<vmem>>, vector<1x32x96xf32>
    %34 = vector.shape_cast %33 : vector<1x32x96xf32> to vector<32x96xf32>
    %cst_19 = arith.constant dense<0.000000e+00> : vector<8x96xf32>
    %35 = tpu.matmul %32, %34, %cst_19 {dimension_numbers = #tpu.dot_dimension_numbers<[1], [0], [0], [1], [0, 0, 1, 1], [], []>} : vector<8x32xf32>, vector<32x96xf32>, vector<8x96xf32> -> vector<8x96xf32>
    %36 = vector.extract_strided_slice %35 {offsets = [0, 0], sizes = [8, 32], strides = [1, 1]} : vector<8x96xf32> to vector<8x32xf32>
    %37 = vector.extract_strided_slice %35 {offsets = [0, 32], sizes = [8, 32], strides = [1, 1]} : vector<8x96xf32> to vector<8x32xf32>
    %38 = vector.extract_strided_slice %35 {offsets = [0, 64], sizes = [8, 32], strides = [1, 1]} : vector<8x96xf32> to vector<8x32xf32>
    %39 = vector.shape_cast %36 : vector<8x32xf32> to vector<8x4x8xf32>
    %40 = tpu.transpose %39, [1, 0, 2] : vector<8x4x8xf32> -> vector<4x8x8xf32>
    %41 = vector.shape_cast %37 : vector<8x32xf32> to vector<8x4x8xf32>
    %42 = tpu.transpose %41, [1, 0, 2] : vector<8x4x8xf32> -> vector<4x8x8xf32>
    %43 = vector.shape_cast %38 : vector<8x32xf32> to vector<8x4x8xf32>
    %44 = tpu.transpose %43, [1, 0, 2] : vector<8x4x8xf32> -> vector<4x8x8xf32>
    "tpu.trace_start"() <{level = 10 : i32, message = "hnd,hmd->hnm"}> : () -> ()
    %cst_20 = arith.constant dense<0.000000e+00> : vector<4x8x8xf32>
    %45 = tpu.matmul %40, %42, %cst_20 {dimension_numbers = #tpu.dot_dimension_numbers<[2], [2], [1], [1], [0, 0, 0, 1, 1, 1], [0], [0]>} : vector<4x8x8xf32>, vector<4x8x8xf32>, vector<4x8x8xf32> -> vector<4x8x8xf32>
    "tpu.trace_stop"() : () -> ()
    %46 = vector.shape_cast %6 : vector<8x8xf32> to vector<1x8x8xf32>
    %47 = vector.broadcast %46 : vector<1x8x8xf32> to vector<4x8x8xf32>
    %48 = arith.addf %45, %47 : vector<4x8x8xf32>
    %cst_21 = arith.constant dense<0xFF800000> : vector<4x8xf32>
    %49 = vector.multi_reduction <maximumf>, %48, %cst_21 [2] : vector<4x8x8xf32> to vector<4x8xf32>
    %50 = vector.shape_cast %49 : vector<4x8xf32> to vector<4x8x1xf32>
    %51 = vector.broadcast %50 : vector<4x8x1xf32> to vector<4x8x8xf32>
    %52 = arith.subf %48, %51 : vector<4x8x8xf32>
    %53 = math.exp %52 : vector<4x8x8xf32>
    %cst_22 = arith.constant dense<0.000000e+00> : vector<4x8xf32>
    %54 = vector.multi_reduction <add>, %53, %cst_22 [2] : vector<4x8x8xf32> to vector<4x8xf32>
    %55 = vector.shape_cast %54 : vector<4x8xf32> to vector<4x8x1xf32>
    %56 = tpu.reciprocal %55 {approx = true} : vector<4x8x1xf32> -> vector<4x8x1xf32>
    %57 = arith.mulf %55, %56 : vector<4x8x1xf32>
    %cst_23 = arith.constant 2.000000e+00 : f32
    %58 = vector.broadcast %cst_23 : f32 to vector<4x8x1xf32>
    %59 = arith.subf %58, %57 : vector<4x8x1xf32>
    %60 = arith.mulf %56, %59 : vector<4x8x1xf32>
    %61 = vector.broadcast %60 : vector<4x8x1xf32> to vector<4x8x8xf32>
    %62 = arith.mulf %53, %61 : vector<4x8x8xf32>
    "tpu.trace_start"() <{level = 10 : i32, message = "hnm,hmd->hnd"}> : () -> ()
    %cst_24 = arith.constant dense<0.000000e+00> : vector<4x8x8xf32>
    %63 = tpu.matmul %62, %44, %cst_24 {dimension_numbers = #tpu.dot_dimension_numbers<[2], [1], [1], [2], [0, 0, 0, 1, 1, 2], [0], [0]>} : vector<4x8x8xf32>, vector<4x8x8xf32>, vector<4x8x8xf32> -> vector<4x8x8xf32>
    "tpu.trace_stop"() : () -> ()
    %64 = tpu.transpose %63, [1, 0, 2] : vector<4x8x8xf32> -> vector<8x4x8xf32>
    %65 = vector.shape_cast %64 : vector<8x4x8xf32> to vector<8x32xf32>
    %c0_25 = arith.constant 0 : index
    %c0_26 = arith.constant 0 : index
    %c0_27 = arith.constant 0 : index
    %66 = vector.load %arg7[%c0_25, %c0_26, %c0_27] : memref<1x32x32xf32, #tpu.memory_space<vmem>>, vector<1x32x32xf32>
    %67 = vector.shape_cast %66 : vector<1x32x32xf32> to vector<32x32xf32>
    %cst_28 = arith.constant dense<0.000000e+00> : vector<8x32xf32>
    %68 = tpu.matmul %65, %67, %cst_28 {dimension_numbers = #tpu.dot_dimension_numbers<[1], [0], [0], [1], [0, 0, 1, 1], [], []>} : vector<8x32xf32>, vector<32x32xf32>, vector<8x32xf32> -> vector<8x32xf32>
    %69 = arith.addf %4, %68 : vector<8x32xf32>
    %c0_29 = arith.constant 0 : index
    %c0_30 = arith.constant 0 : index
    %c0_31 = arith.constant 0 : index
    %70 = vector.load %arg8[%c0_29, %c0_30, %c0_31] : memref<1x1x32xf32, #tpu.memory_space<vmem>>, vector<1x1x32xf32>
    %71 = vector.shape_cast %70 : vector<1x1x32xf32> to vector<1x32xf32>
    %c0_32 = arith.constant 0 : index
    %c0_33 = arith.constant 0 : index
    %c0_34 = arith.constant 0 : index
    %72 = vector.load %arg9[%c0_32, %c0_33, %c0_34] : memref<1x1x32xf32, #tpu.memory_space<vmem>>, vector<1x1x32xf32>
    %73 = vector.shape_cast %72 : vector<1x1x32xf32> to vector<1x32xf32>
    %cst_35 = arith.constant dense<0.000000e+00> : vector<8xf32>
    %74 = vector.multi_reduction <add>, %69, %cst_35 [1] : vector<8x32xf32> to vector<8xf32>
    %75 = vector.shape_cast %74 : vector<8xf32> to vector<8x1xf32>
    %cst_36 = arith.constant 3.200000e+01 : f32
    %76 = vector.broadcast %cst_36 : f32 to vector<8x1xf32>
    %77 = arith.divf %75, %76 : vector<8x1xf32>
    %78 = arith.mulf %69, %69 : vector<8x32xf32>
    %cst_37 = arith.constant dense<0.000000e+00> : vector<8xf32>
    %79 = vector.multi_reduction <add>, %78, %cst_37 [1] : vector<8x32xf32> to vector<8xf32>
    %80 = vector.shape_cast %79 : vector<8xf32> to vector<8x1xf32>
    %cst_38 = arith.constant 3.200000e+01 : f32
    %81 = vector.broadcast %cst_38 : f32 to vector<8x1xf32>
    %82 = arith.divf %80, %81 : vector<8x1xf32>
    %83 = arith.mulf %77, %77 : vector<8x1xf32>
    %84 = arith.subf %82, %83 : vector<8x1xf32>
    %85 = vector.broadcast %77 : vector<8x1xf32> to vector<8x32xf32>
    %86 = arith.subf %69, %85 : vector<8x32xf32>
    %cst_39 = arith.constant 9.99999974E-6 : f32
    %87 = vector.broadcast %cst_39 : f32 to vector<8x1xf32>
    %88 = arith.addf %84, %87 : vector<8x1xf32>
    %89 = math.rsqrt %88 : vector<8x1xf32>
    %90 = vector.broadcast %89 : vector<8x1xf32> to vector<8x32xf32>
    %91 = arith.mulf %86, %90 : vector<8x32xf32>
    %92 = vector.broadcast %71 : vector<1x32xf32> to vector<8x32xf32>
    %93 = arith.mulf %91, %92 : vector<8x32xf32>
    %94 = vector.broadcast %73 : vector<1x32xf32> to vector<8x32xf32>
    %95 = arith.addf %93, %94 : vector<8x32xf32>
    %c0_40 = arith.constant 0 : index
    %c0_41 = arith.constant 0 : index
    %c0_42 = arith.constant 0 : index
    %96 = vector.load %arg10[%c0_40, %c0_41, %c0_42] : memref<1x32x64xf32, #tpu.memory_space<vmem>>, vector<1x32x64xf32>
    %97 = vector.shape_cast %96 : vector<1x32x64xf32> to vector<32x64xf32>
    %cst_43 = arith.constant dense<0.000000e+00> : vector<8x64xf32>
    %98 = tpu.matmul %95, %97, %cst_43 {dimension_numbers = #tpu.dot_dimension_numbers<[1], [0], [0], [1], [0, 0, 1, 1], [], []>} : vector<8x32xf32>, vector<32x64xf32>, vector<8x64xf32> -> vector<8x64xf32>
    %c0_44 = arith.constant 0 : index
    %c0_45 = arith.constant 0 : index
    %c0_46 = arith.constant 0 : index
    %99 = vector.load %arg11[%c0_44, %c0_45, %c0_46] : memref<1x1x64xf32, #tpu.memory_space<vmem>>, vector<1x1x64xf32>
    %100 = vector.shape_cast %99 : vector<1x1x64xf32> to vector<1x64xf32>
    %101 = vector.broadcast %100 : vector<1x64xf32> to vector<8x64xf32>
    %102 = arith.addf %98, %101 : vector<8x64xf32>
    %cst_47 = arith.constant 5.000000e-01 : f32
    %103 = vector.broadcast %cst_47 : f32 to vector<8x64xf32>
    %104 = arith.mulf %103, %102 : vector<8x64xf32>
    %cst_48 = arith.constant 0.707106769 : f32
    %105 = vector.broadcast %cst_48 : f32 to vector<8x64xf32>
    %106 = arith.mulf %102, %105 : vector<8x64xf32>
    %107 = math.erf %106 : vector<8x64xf32>
    %cst_49 = arith.constant 1.000000e+00 : f32
    %108 = vector.broadcast %cst_49 : f32 to vector<8x64xf32>
    %109 = arith.addf %108, %107 : vector<8x64xf32>
    %110 = arith.mulf %104, %109 : vector<8x64xf32>
    %c0_50 = arith.constant 0 : index
    %c0_51 = arith.constant 0 : index
    %c0_52 = arith.constant 0 : index
    %111 = vector.load %arg12[%c0_50, %c0_51, %c0_52] : memref<1x64x32xf32, #tpu.memory_space<vmem>>, vector<1x64x32xf32>
    %112 = vector.shape_cast %111 : vector<1x64x32xf32> to vector<64x32xf32>
    %cst_53 = arith.constant dense<0.000000e+00> : vector<8x32xf32>
    %113 = tpu.matmul %110, %112, %cst_53 {dimension_numbers = #tpu.dot_dimension_numbers<[1], [0], [0], [1], [0, 0, 1, 1], [], []>} : vector<8x64xf32>, vector<64x32xf32>, vector<8x32xf32> -> vector<8x32xf32>
    %c0_54 = arith.constant 0 : index
    %c0_55 = arith.constant 0 : index
    %c0_56 = arith.constant 0 : index
    %114 = vector.load %arg13[%c0_54, %c0_55, %c0_56] : memref<1x1x32xf32, #tpu.memory_space<vmem>>, vector<1x1x32xf32>
    %115 = vector.shape_cast %114 : vector<1x1x32xf32> to vector<1x32xf32>
    %116 = vector.broadcast %115 : vector<1x32xf32> to vector<8x32xf32>
    %117 = arith.addf %113, %116 : vector<8x32xf32>
    %118 = arith.addf %69, %117 : vector<8x32xf32>
    %c0_57 = arith.constant 0 : index
    %c0_58 = arith.constant 0 : index
    %c0_59 = arith.constant 0 : index
    %119 = vector.load %arg14[%c0_57, %c0_58, %c0_59] : memref<1x8x32xf32, #tpu.memory_space<vmem>>, vector<1x8x32xf32>
    %120 = vector.shape_cast %119 : vector<1x8x32xf32> to vector<8x32xf32>
    %121 = vector.shape_cast %118 : vector<8x32xf32> to vector<1x8x32xf32>
    tpu.vector_store %arg14[%c0_57, %c0_58, %c0_59], %121 {strides = array<i32>} : memref<1x8x32xf32, #tpu.memory_space<vmem>>, vector<1x8x32xf32>,
    return
  }
  func.func @transform_0(%arg0: i32, %arg1: i32) -> (i32, i32, i32) {
    %c0_i32 = arith.constant 0 : i32
    %c0_i32_0 = arith.constant 0 : i32
    %c0_i32_1 = arith.constant 0 : i32
    return %arg0, %c0_i32, %c0_i32_0 : i32, i32, i32
  }
  func.func @transform_1(%arg0: i32, %arg1: i32) -> (i32, i32, i32) {
    %c0_i32 = arith.constant 0 : i32
    %c0_i32_0 = arith.constant 0 : i32
    %c0_i32_1 = arith.constant 0 : i32
    return %arg0, %c0_i32, %c0_i32_0 : i32, i32, i32
  }
  func.func @transform_2(%arg0: i32, %arg1: i32) -> (i32, i32, i32) {
    %c0_i32 = arith.constant 0 : i32
    %c0_i32_0 = arith.constant 0 : i32
    %c0_i32_1 = arith.constant 0 : i32
    return %arg1, %c0_i32, %c0_i32_0 : i32, i32, i32
  }
  func.func @transform_3(%arg0: i32, %arg1: i32) -> (i32, i32, i32) {
    %c0_i32 = arith.constant 0 : i32
    %c0_i32_0 = arith.constant 0 : i32
    %c0_i32_1 = arith.constant 0 : i32
    return %arg1, %c0_i32, %c0_i32_0 : i32, i32, i32
  }
  func.func @transform_4(%arg0: i32, %arg1: i32) -> (i32, i32, i32) {
    %c0_i32 = arith.constant 0 : i32
    %c0_i32_0 = arith.constant 0 : i32
    %c0_i32_1 = arith.constant 0 : i32
    return %arg1, %c0_i32, %c0_i32_0 : i32, i32, i32
  }
  func.func @transform_5(%arg0: i32, %arg1: i32) -> (i32, i32, i32) {
    %c0_i32 = arith.constant 0 : i32
    %c0_i32_0 = arith.constant 0 : i32
    %c0_i32_1 = arith.constant 0 : i32
    return %arg1, %c0_i32, %c0_i32_0 : i32, i32, i32
  }
  func.func @transform_6(%arg0: i32, %arg1: i32) -> (i32, i32, i32) {
    %c0_i32 = arith.constant 0 : i32
    %c0_i32_0 = arith.constant 0 : i32
    %c0_i32_1 = arith.constant 0 : i32
    return %arg1, %c0_i32, %c0_i32_0 : i32, i32, i32
  }
  func.func @transform_7(%arg0: i32, %arg1: i32) -> (i32, i32, i32) {
    %c0_i32 = arith.constant 0 : i32
    %c0_i32_0 = arith.constant 0 : i32
    %c0_i32_1 = arith.constant 0 : i32
    return %arg1, %c0_i32, %c0_i32_0 : i32, i32, i32
  }
  func.func @transform_8(%arg0: i32, %arg1: i32) -> (i32, i32, i32) {
    %c0_i32 = arith.constant 0 : i32
    %c0_i32_0 = arith.constant 0 : i32
    %c0_i32_1 = arith.constant 0 : i32
    return %arg1, %c0_i32, %c0_i32_0 : i32, i32, i32
  }
  func.func @transform_9(%arg0: i32, %arg1: i32) -> (i32, i32, i32) {
    %c0_i32 = arith.constant 0 : i32
    %c0_i32_0 = arith.constant 0 : i32
    %c0_i32_1 = arith.constant 0 : i32
    return %arg1, %c0_i32, %c0_i32_0 : i32, i32, i32
  }
  func.func @transform_10(%arg0: i32, %arg1: i32) -> (i32, i32, i32) {
    %c0_i32 = arith.constant 0 : i32
    %c0_i32_0 = arith.constant 0 : i32
    %c0_i32_1 = arith.constant 0 : i32
    return %arg1, %c0_i32, %c0_i32_0 : i32, i32, i32
  }
  func.func @transform_11(%arg0: i32, %arg1: i32) -> (i32, i32, i32) {
    %c0_i32 = arith.constant 0 : i32
    %c0_i32_0 = arith.constant 0 : i32
    %c0_i32_1 = arith.constant 0 : i32
    return %arg1, %c0_i32, %c0_i32_0 : i32, i32, i32
  }
  func.func @transform_12(%arg0: i32, %arg1: i32) -> (i32, i32, i32) {
    %c0_i32 = arith.constant 0 : i32
    %c0_i32_0 = arith.constant 0 : i32
    %c0_i32_1 = arith.constant 0 : i32
    return %arg0, %c0_i32, %c0_i32_0 : i32, i32, i32
  }
}

</mosaic_0001>

<llo_original>
// kernel: tpu_custom_call.1
$region0: #{tpu_custom_call.1}
  #allocation0 [shape = 'u32[]', space=smem, size = 0x4, offset = 0x4, fixed_abs, tag = 'smem constant byte address 0x4 - core index']
  #allocation1 [shape = 'u32[72,128]{1,0:T(1,128)}', space=vmem, size = 0x9000, scoped, tag = 'internal scratch']
  %s0 = inlined_call_operand.hbm [shape: f32[2,8,32], index: 0, kind: input, shape index: {}]
  %s1 = inlined_call_operand.hbm [shape: f32[2,8,8], index: 1, kind: input, shape index: {}]
  %s2 = inlined_call_operand.hbm [shape: f32[2,1,32], index: 2, kind: input, shape index: {}]
  %s3 = inlined_call_operand.vmem [shape: f32[2,1,32], index: 3, kind: input, shape index: {}]
  %s4 = inlined_call_operand.vmem [shape: f32[2,32,96], index: 4, kind: input, shape index: {}]
  %s5 = inlined_call_operand.vmem [shape: f32[2,32,32], index: 5, kind: input, shape index: {}]
  %s6 = inlined_call_operand.vmem [shape: f32[2,1,32], index: 6, kind: input, shape index: {}]
  %s7 = inlined_call_operand.hbm [shape: f32[2,1,32], index: 7, kind: input, shape index: {}]
  %s8 = inlined_call_operand.vmem [shape: f32[2,32,64], index: 8, kind: input, shape index: {}]
  %s9 = inlined_call_operand.vmem [shape: f32[2,1,64], index: 9, kind: input, shape index: {}]
  %s10 = inlined_call_operand.vmem [shape: f32[2,64,32], index: 10, kind: input, shape index: {}]
  %s11 = inlined_call_operand.vmem [shape: f32[2,1,32], index: 11, kind: input, shape index: {}]
  %s12 = inlined_call_operand.hbm [shape: f32[2,8,32], index: 12, kind: output, shape index: {}]
  %s13 = sld [smem:[#allocation0]]
  $region101: #{tpu_custom_call.1} parent=0
    _
  %s15 = ssub.s32 1, %s13
  %s16 = scalar_select 0, %s15, %s13
  $region1: #{tpu_custom_call.1} parent=0
    #allocation2 [shape = 'u8[8192]{0}', space=vmem, size = 0x2000, scoped, tag = 'input window, operand 0']
    #allocation3 [shape = 's32[2]{0}', space=sflag, size = 0x8, scoped, tag = 'scoped memory for tpu_custom_call.1']
    #allocation4 [shape = 's32[2]{0}', space=sflag, size = 0x8, scoped, tag = 'scoped memory for tpu_custom_call.1']
    #allocation5 [shape = 'u8[8192]{0}', space=vmem, size = 0x2000, scoped, tag = 'input window, operand 1']
    #allocation6 [shape = 's32[2]{0}', space=sflag, size = 0x8, scoped, tag = 'scoped memory for tpu_custom_call.1']
    #allocation7 [shape = 'u8[1024]{0}', space=vmem, size = 0x400, scoped, tag = 'input window, operand 2']
    #allocation8 [shape = 'u8[1024]{0}', space=vmem, size = 0x400, scoped, tag = 'input window, operand 7']
    #allocation9 [shape = 's32[2]{0}', space=sflag, size = 0x8, scoped, tag = 'scoped memory for tpu_custom_call.1']
    #allocation10 [shape = 'u8[8192]{0}', space=vmem, size = 0x2000, scoped, tag = 'output window, operand 0']
    %17 = vsyncpa [#allocation3], 0
    %s18 = scalar_lea.sflag [#allocation3], 1
    %19 = vsyncpa %s18, 0
    %20 = vsyncpa [#allocation6], 0
    %s21 = scalar_lea.sflag [#allocation6], 1
    %22 = vsyncpa %s21, 0
    %23 = vsyncpa [#allocation9], 0
    %s24 = scalar_lea.sflag [#allocation9], 1
    %25 = vsyncpa %s24, 0
    %26 = vsyncpa [#allocation4], 0
    %s27 = scalar_lea.sflag [#allocation4], 1
    %28 = vsyncpa %s27, 0
    loop: start=0, step=1, limit=6
    $region2: #{tpu_custom_call.1} parent=1 // loop_pre_header
      _
    $region3: #{tpu_custom_call.1} parent=1 // loop_header
      %s30 = sphi 0, %s34
      %p31 = scmp.ge.s32.totalorder %s30, 6
      %s37 = sphi 0, %s49
      %s38 = sphi 0, %s45
      %s39 = sphi 0, %s37
      %s40 = sphi 0, %s38
      %s41 = sphi 0, %s39
      %s42 = sphi 0, %s40
      %s52 = sphi 0, %s54
      %s55 = sphi 0, %s52
      %s56 = sphi 0, %s55
      %s72 = sphi 0, %s56
      %s78 = sphi 0, %s80
      %s81 = sphi 0, %s78
      %s82 = sphi 0, %s81
      %s98 = sphi 0, %s82
      %s104 = sphi 0, %s106
      %s107 = sphi 0, %s104
      %s108 = sphi 0, %s107
      %s124 = sphi 0, %s108
      %s130 = sphi 0, %s132
      %s133 = sphi 0, %s130
      %s134 = sphi 0, %s133
      %s150 = sphi 0, %s134
      %s156 = sphi 0, %s158
      %s159 = sphi 0, %s156
      %s160 = sphi 0, %s159
      %s176 = sphi 0, %s160
      %s182 = sphi 0, %s184
      %s185 = sphi 0, %s182
      %s186 = sphi 0, %s185
      %s202 = sphi 0, %s186
      %s208 = sphi 0, %s210
      %s211 = sphi 0, %s208
      %s212 = sphi 0, %s211
      %s228 = sphi 0, %s212
      %s234 = sphi 0, %s236
      %s237 = sphi 0, %s234
      %s238 = sphi 0, %s237
      %s254 = sphi 0, %s238
      %s260 = sphi 0, %s262
      %s263 = sphi 0, %s260
      %s264 = sphi 0, %s263
      %s280 = sphi 0, %s264
      %s286 = sphi 0, %s288
      %s289 = sphi 0, %s286
      %s290 = sphi 0, %s289
      %s306 = sphi 0, %s290
      %s312 = sphi 0, %s314
      %s315 = sphi 0, %s312
      %s316 = sphi 0, %s315
      %s332 = sphi 0, %s316
      %s338 = sphi 0, %s340
      %s341 = sphi 0, %s338
      %s342 = sphi 0, %s341
      %s358 = sphi 0, %s342
      %s364 = sphi 0, %s366
      %s367 = sphi 0, %s364
      %s368 = sphi 0, %s367
      %s384 = sphi 0, %s368
    $region4: #{tpu_custom_call.1} parent=1 // loop_header_branch
      %33 = sbr.rel (%p31) target = $region8
    $region5: #{tpu_custom_call.1} parent=1 // loop_body
      %s35 = ssub.s32 %s30, 1
      %s36 = ssub.s32 %s30, 2
      %s43 = sadd.s32 1, %s38
      %p44 = scmp.ge.s32.totalorder %s43, 2
      %s45 = scalar_select %p44, 0, %s43
      %s46 = sadd.s32 1, %s37
      %s47 = scalar_select %p44, %s46, %s37
      %p48 = scmp.ge.s32.totalorder %s47, 2
      %s49 = scalar_select %p48, 0, %s47
      %s50 = ssub.s32 %s37, %s49
      %p51 = scmp.eq.s32.totalorder %s50, 0
      %s53 = sadd.s32 %s52, 1
      %s54 = scalar_select %p51, %s52, %s53
      %p57 = pneg %p51
      %p58 = scmp.eq.s32.totalorder %s30, 3
      %p59 = por %p57, %p58
      %p60 = scmp.ne.s32.totalorder %s52, %s55
      %p61 = scmp.eq.s32.totalorder %s30, 0
      %p62 = por %p60, %p61
      %p63 = scmp.ne.s32.totalorder %s52, %s55
      %p64 = scmp.eq.s32.totalorder %s35, 3
      %p65 = por %p63, %p64
      %p66 = scmp.ne.s32.totalorder %s55, %s56
      %p67 = scmp.eq.s32.totalorder %s35, 0
      %p68 = por %p66, %p67
      %p69 = scmp.ne.s32.totalorder %s55, %s56
      %p70 = scmp.eq.s32.totalorder %s36, 3
      %p71 = por %p69, %p70
      %p73 = scmp.ne.s32.totalorder %s56, %s72
      %p74 = scmp.eq.s32.totalorder %s36, 0
      %p75 = por %p73, %p74
      %s76 = ssub.s32 %s37, %s49
      %p77 = scmp.eq.s32.totalorder %s76, 0
      %s79 = sadd.s32 %s78, 1
      %s80 = scalar_select %p77, %s78, %s79
      %p83 = pneg %p77
      %p84 = scmp.eq.s32.totalorder %s30, 3
      %p85 = por %p83, %p84
      %p86 = scmp.ne.s32.totalorder %s78, %s81
      %p87 = scmp.eq.s32.totalorder %s30, 0
      %p88 = por %p86, %p87
      %p89 = scmp.ne.s32.totalorder %s78, %s81
      %p90 = scmp.eq.s32.totalorder %s35, 3
      %p91 = por %p89, %p90
      %p92 = scmp.ne.s32.totalorder %s81, %s82
      %p93 = scmp.eq.s32.totalorder %s35, 0
      %p94 = por %p92, %p93
      %p95 = scmp.ne.s32.totalorder %s81, %s82
      %p96 = scmp.eq.s32.totalorder %s36, 3
      %p97 = por %p95, %p96
      %p99 = scmp.ne.s32.totalorder %s82, %s98
      %p100 = scmp.eq.s32.totalorder %s36, 0
      %p101 = por %p99, %p100
      %s102 = ssub.s32 %s38, %s45
      %p103 = scmp.eq.s32.totalorder %s102, 0
      %s105 = sadd.s32 %s104, 1
      %s106 = scalar_select %p103, %s104, %s105
      %p109 = pneg %p103
      %p110 = scmp.eq.s32.totalorder %s30, 3
      %p111 = por %p109, %p110
      %p112 = scmp.ne.s32.totalorder %s104, %s107
      %p113 = scmp.eq.s32.totalorder %s30, 0
      %p114 = por %p112, %p113
      %p115 = scmp.ne.s32.totalorder %s104, %s107
      %p116 = scmp.eq.s32.totalorder %s35, 3
      %p117 = por %p115, %p116
      %p118 = scmp.ne.s32.totalorder %s107, %s108
      %p119 = scmp.eq.s32.totalorder %s35, 0
      %p120 = por %p118, %p119
      %p121 = scmp.ne.s32.totalorder %s107, %s108
      %p122 = scmp.eq.s32.totalorder %s36, 3
      %p123 = por %p121, %p122
      %p125 = scmp.ne.s32.totalorder %s108, %s124
      %p126 = scmp.eq.s32.totalorder %s36, 0
      %p127 = por %p125, %p126
      %s128 = ssub.s32 %s38, %s45
      %p129 = scmp.eq.s32.totalorder %s128, 0
      %s131 = sadd.s32 %s130, 1
      %s132 = scalar_select %p129, %s130, %s131
      %p135 = pneg %p129
      %p136 = scmp.eq.s32.totalorder %s30, 3
      %p137 = por %p135, %p136
      %p138 = scmp.ne.s32.totalorder %s130, %s133
      %p139 = scmp.eq.s32.totalorder %s30, 0
      %p140 = por %p138, %p139
      %p141 = scmp.ne.s32.totalorder %s130, %s133
      %p142 = scmp.eq.s32.totalorder %s35, 3
      %p143 = por %p141, %p142
      %p144 = scmp.ne.s32.totalorder %s133, %s134
      %p145 = scmp.eq.s32.totalorder %s35, 0
      %p146 = por %p144, %p145
      %p147 = scmp.ne.s32.totalorder %s133, %s134
      %p148 = scmp.eq.s32.totalorder %s36, 3
      %p149 = por %p147, %p148
      %p151 = scmp.ne.s32.totalorder %s134, %s150
      %p152 = scmp.eq.s32.totalorder %s36, 0
      %p153 = por %p151, %p152
      %s154 = ssub.s32 %s38, %s45
      %p155 = scmp.eq.s32.totalorder %s154, 0
      %s157 = sadd.s32 %s156, 1
      %s158 = scalar_select %p155, %s156, %s157
      %p161 = pneg %p155
      %p162 = scmp.eq.s32.totalorder %s30, 3
      %p163 = por %p161, %p162
      %p164 = scmp.ne.s32.totalorder %s156, %s159
      %p165 = scmp.eq.s32.totalorder %s30, 0
      %p166 = por %p164, %p165
      %p167 = scmp.ne.s32.totalorder %s156, %s159
      %p168 = scmp.eq.s32.totalorder %s35, 3
      %p169 = por %p167, %p168
      %p170 = scmp.ne.s32.totalorder %s159, %s160
      %p171 = scmp.eq.s32.totalorder %s35, 0
      %p172 = por %p170, %p171
      %p173 = scmp.ne.s32.totalorder %s159, %s160
      %p174 = scmp.eq.s32.totalorder %s36, 3
      %p175 = por %p173, %p174
      %p177 = scmp.ne.s32.totalorder %s160, %s176
      %p178 = scmp.eq.s32.totalorder %s36, 0
      %p179 = por %p177, %p178
      %s180 = ssub.s32 %s38, %s45
      %p181 = scmp.eq.s32.totalorder %s180, 0
      %s183 = sadd.s32 %s182, 1
      %s184 = scalar_select %p181, %s182, %s183
      %p187 = pneg %p181
      %p188 = scmp.eq.s32.totalorder %s30, 3
      %p189 = por %p187, %p188
      %p190 = scmp.ne.s32.totalorder %s182, %s185
      %p191 = scmp.eq.s32.totalorder %s30, 0
      %p192 = por %p190, %p191
      %p193 = scmp.ne.s32.totalorder %s182, %s185
      %p194 = scmp.eq.s32.totalorder %s35, 3
      %p195 = por %p193, %p194
      %p196 = scmp.ne.s32.totalorder %s185, %s186
      %p197 = scmp.eq.s32.totalorder %s35, 0
      %p198 = por %p196, %p197
      %p199 = scmp.ne.s32.totalorder %s185, %s186
      %p200 = scmp.eq.s32.totalorder %s36, 3
      %p201 = por %p199, %p200
      %p203 = scmp.ne.s32.totalorder %s186, %s202
      %p204 = scmp.eq.s32.totalorder %s36, 0
      %p205 = por %p203, %p204
      %s206 = ssub.s32 %s38, %s45
      %p207 = scmp.eq.s32.totalorder %s206, 0
      %s209 = sadd.s32 %s208, 1
      %s210 = scalar_select %p207, %s208, %s209
      %p213 = pneg %p207
      %p214 = scmp.eq.s32.totalorder %s30, 3
      %p215 = por %p213, %p214
      %p216 = scmp.ne.s32.totalorder %s208, %s211
      %p217 = scmp.eq.s32.totalorder %s30, 0
      %p218 = por %p216, %p217
      %p219 = scmp.ne.s32.totalorder %s208, %s211
      %p220 = scmp.eq.s32.totalorder %s35, 3
      %p221 = por %p219, %p220
      %p222 = scmp.ne.s32.totalorder %s211, %s212
      %p223 = scmp.eq.s32.totalorder %s35, 0
      %p224 = por %p222, %p223
      %p225 = scmp.ne.s32.totalorder %s211, %s212
      %p226 = scmp.eq.s32.totalorder %s36, 3
      %p227 = por %p225, %p226
      %p229 = scmp.ne.s32.totalorder %s212, %s228
      %p230 = scmp.eq.s32.totalorder %s36, 0
      %p231 = por %p229, %p230
      %s232 = ssub.s32 %s38, %s45
      %p233 = scmp.eq.s32.totalorder %s232, 0
      %s235 = sadd.s32 %s234, 1
      %s236 = scalar_select %p233, %s234, %s235
      %p239 = pneg %p233
      %p240 = scmp.eq.s32.totalorder %s30, 3
      %p241 = por %p239, %p240
      %p242 = scmp.ne.s32.totalorder %s234, %s237
      %p243 = scmp.eq.s32.totalorder %s30, 0
      %p244 = por %p242, %p243
      %p245 = scmp.ne.s32.totalorder %s234, %s237
      %p246 = scmp.eq.s32.totalorder %s35, 3
      %p247 = por %p245, %p246
      %p248 = scmp.ne.s32.totalorder %s237, %s238
      %p249 = scmp.eq.s32.totalorder %s35, 0
      %p250 = por %p248, %p249
      %p251 = scmp.ne.s32.totalorder %s237, %s238
      %p252 = scmp.eq.s32.totalorder %s36, 3
      %p253 = por %p251, %p252
      %p255 = scmp.ne.s32.totalorder %s238, %s254
      %p256 = scmp.eq.s32.totalorder %s36, 0
      %p257 = por %p255, %p256
      %s258 = ssub.s32 %s38, %s45
      %p259 = scmp.eq.s32.totalorder %s258, 0
      %s261 = sadd.s32 %s260, 1
      %s262 = scalar_select %p259, %s260, %s261
      %p265 = pneg %p259
      %p266 = scmp.eq.s32.totalorder %s30, 3
      %p267 = por %p265, %p266
      %p268 = scmp.ne.s32.totalorder %s260, %s263
      %p269 = scmp.eq.s32.totalorder %s30, 0
      %p270 = por %p268, %p269
      %p271 = scmp.ne.s32.totalorder %s260, %s263
      %p272 = scmp.eq.s32.totalorder %s35, 3
      %p273 = por %p271, %p272
      %p274 = scmp.ne.s32.totalorder %s263, %s264
      %p275 = scmp.eq.s32.totalorder %s35, 0
      %p276 = por %p274, %p275
      %p277 = scmp.ne.s32.totalorder %s263, %s264
      %p278 = scmp.eq.s32.totalorder %s36, 3
      %p279 = por %p277, %p278
      %p281 = scmp.ne.s32.totalorder %s264, %s280
      %p282 = scmp.eq.s32.totalorder %s36, 0
      %p283 = por %p281, %p282
      %s284 = ssub.s32 %s38, %s45
      %p285 = scmp.eq.s32.totalorder %s284, 0
      %s287 = sadd.s32 %s286, 1
      %s288 = scalar_select %p285, %s286, %s287
      %p291 = pneg %p285
      %p292 = scmp.eq.s32.totalorder %s30, 3
      %p293 = por %p291, %p292
      %p294 = scmp.ne.s32.totalorder %s286, %s289
      %p295 = scmp.eq.s32.totalorder %s30, 0
      %p296 = por %p294, %p295
      %p297 = scmp.ne.s32.totalorder %s286, %s289
      %p298 = scmp.eq.s32.totalorder %s35, 3
      %p299 = por %p297, %p298
      %p300 = scmp.ne.s32.totalorder %s289, %s290
      %p301 = scmp.eq.s32.totalorder %s35, 0
      %p302 = por %p300, %p301
      %p303 = scmp.ne.s32.totalorder %s289, %s290
      %p304 = scmp.eq.s32.totalorder %s36, 3
      %p305 = por %p303, %p304
      %p307 = scmp.ne.s32.totalorder %s290, %s306
      %p308 = scmp.eq.s32.totalorder %s36, 0
      %p309 = por %p307, %p308
      %s310 = ssub.s32 %s38, %s45
      %p311 = scmp.eq.s32.totalorder %s310, 0
      %s313 = sadd.s32 %s312, 1
      %s314 = scalar_select %p311, %s312, %s313
      %p317 = pneg %p311
      %p318 = scmp.eq.s32.totalorder %s30, 3
      %p319 = por %p317, %p318
      %p320 = scmp.ne.s32.totalorder %s312, %s315
      %p321 = scmp.eq.s32.totalorder %s30, 0
      %p322 = por %p320, %p321
      %p323 = scmp.ne.s32.totalorder %s312, %s315
      %p324 = scmp.eq.s32.totalorder %s35, 3
      %p325 = por %p323, %p324
      %p326 = scmp.ne.s32.totalorder %s315, %s316
      %p327 = scmp.eq.s32.totalorder %s35, 0
      %p328 = por %p326, %p327
      %p329 = scmp.ne.s32.totalorder %s315, %s316
      %p330 = scmp.eq.s32.totalorder %s36, 3
      %p331 = por %p329, %p330
      %p333 = scmp.ne.s32.totalorder %s316, %s332
      %p334 = scmp.eq.s32.totalorder %s36, 0
      %p335 = por %p333, %p334
      %s336 = ssub.s32 %s38, %s45
      %p337 = scmp.eq.s32.totalorder %s336, 0
      %s339 = sadd.s32 %s338, 1
      %s340 = scalar_select %p337, %s338, %s339
      %p343 = pneg %p337
      %p344 = scmp.eq.s32.totalorder %s30, 3
      %p345 = por %p343, %p344
      %p346 = scmp.ne.s32.totalorder %s338, %s341
      %p347 = scmp.eq.s32.totalorder %s30, 0
      %p348 = por %p346, %p347
      %p349 = scmp.ne.s32.totalorder %s338, %s341
      %p350 = scmp.eq.s32.totalorder %s35, 3
      %p351 = por %p349, %p350
      %p352 = scmp.ne.s32.totalorder %s341, %s342
      %p353 = scmp.eq.s32.totalorder %s35, 0
      %p354 = por %p352, %p353
      %p355 = scmp.ne.s32.totalorder %s341, %s342
      %p356 = scmp.eq.s32.totalorder %s36, 3
      %p357 = por %p355, %p356
      %p359 = scmp.ne.s32.totalorder %s342, %s358
      %p360 = scmp.eq.s32.totalorder %s36, 0
      %p361 = por %p359, %p360
      %s362 = ssub.s32 %s37, %s49
      %p363 = scmp.eq.s32.totalorder %s362, 0
      %s365 = sadd.s32 %s364, 1
      %s366 = scalar_select %p363, %s364, %s365
      %p369 = pneg %p363
      %p370 = scmp.eq.s32.totalorder %s30, 3
      %p371 = por %p369, %p370
      %p372 = scmp.ne.s32.totalorder %s364, %s367
      %p373 = scmp.eq.s32.totalorder %s30, 0
      %p374 = por %p372, %p373
      %p375 = scmp.ne.s32.totalorder %s364, %s367
      %p376 = scmp.eq.s32.totalorder %s35, 3
      %p377 = por %p375, %p376
      %p378 = scmp.ne.s32.totalorder %s367, %s368
      %p379 = scmp.eq.s32.totalorder %s35, 0
      %p380 = por %p378, %p379
      %p381 = scmp.ne.s32.totalorder %s367, %s368
      %p382 = scmp.eq.s32.totalorder %s36, 3
      %p383 = por %p381, %p382
      %p385 = scmp.ne.s32.totalorder %s368, %s384
      %p386 = scmp.eq.s32.totalorder %s36, 0
      %p387 = por %p385, %p386
      %p388 = scmp.le.s32.totalorder 1, %s30
      %p389 = scmp.lt.s32.totalorder %s30, 5
      %p390 = pnand %p388, %p389
      %p391 = pneg %p390
      // Predicated region
      $region9: #{tpu_custom_call.1} parent=5 // pred_check
        _
      $region10: #{tpu_custom_call.1} parent=5 // pred_check_branch
        %393 = sbr.rel (%p390) target = $region12
      $region11: #{tpu_custom_call.1} parent=5 // pred_region
        %s394 = ssub.s32 %s30, 1
      $region12: #{tpu_custom_call.1} parent=5 // pred_fallthru
        _
      %p395 = scmp.lt.s32.totalorder %s30, 4
      // Predicated region
      $region13: #{tpu_custom_call.1} parent=5 // pred_check
        %p396 = pneg %p395
      $region14: #{tpu_custom_call.1} parent=5 // pred_check_branch
        %398 = sbr.rel (%p396) target = $region16
      $region15: #{tpu_custom_call.1} parent=5 // pred_region
        // Predicated region
        $region17: #{tpu_custom_call.1} parent=15 // pred_check
          %p399 = pneg %p62
        $region18: #{tpu_custom_call.1} parent=15 // pred_check_branch
          %401 = sbr.rel (%p399) target = $region20
        $region19: #{tpu_custom_call.1} parent=15 // pred_region
          %s402 = sand.u32 %s52, 1
          %s403 = scalar_lea.sflag [#allocation3], %s402
          %s404 = sand.u32 %s52, 1
          %s405 = smul.addr %s404, 8
          %s406 = scalar_lea.vmem [#allocation2], %s405
          %408 = vsyncadd %s403, 0
          %s409 = smul.addr %s37, 8
          %s410 = scalar_lea.hbm %s0, %s409
          %s412 = sshll.u32 %s410, 4
          %s413 = int_to_ptr.hbm [resolvable:$true] %s412
          %s414 = sshll.u32 %s406, 4
          %s415 = int_to_ptr.vmem [resolvable:$true] %s414
          %417 = dma.hbm_to_vmem [thread:$0]  %s413, 128, %s415, %s403
        $region20: #{tpu_custom_call.1} parent=15 // pred_fallthru
          _
        // Predicated region
        $region21: #{tpu_custom_call.1} parent=15 // pred_check
          %p418 = pneg %p88
        $region22: #{tpu_custom_call.1} parent=15 // pred_check_branch
          %420 = sbr.rel (%p418) target = $region24
        $region23: #{tpu_custom_call.1} parent=15 // pred_region
          %s421 = sand.u32 %s30, 1
          %s422 = scalar_lea.sflag [#allocation6], %s421
          %s423 = sand.u32 %s78, 1
          %s424 = smul.addr %s423, 8
          %s425 = scalar_lea.vmem [#allocation5], %s424
          %427 = vsyncadd %s422, 0
          %s428 = smul.addr %s37, 8
          %s429 = scalar_lea.hbm %s1, %s428
          %s431 = sshll.u32 %s429, 4
          %s432 = int_to_ptr.hbm [resolvable:$true] %s431
          %s433 = sshll.u32 %s425, 4
          %s434 = int_to_ptr.vmem [resolvable:$true] %s433
          %436 = dma.hbm_to_vmem [thread:$0]  %s432, 128, %s434, %s422
        $region24: #{tpu_custom_call.1} parent=15 // pred_fallthru
          _
        // Predicated region
        $region25: #{tpu_custom_call.1} parent=15 // pred_check
          %p437 = pneg %p114
        $region26: #{tpu_custom_call.1} parent=15 // pred_check_branch
          %439 = sbr.rel (%p437) target = $region28
        $region27: #{tpu_custom_call.1} parent=15 // pred_region
          %s440 = sand.u32 %s30, 1
          %s441 = scalar_lea.sflag [#allocation6], %s440
          %s442 = sand.u32 %s104, 1
          %s443 = scalar_lea.vmem [#allocation7], %s442
          %445 = vsyncadd %s441, 0
          %s446 = scalar_lea.hbm %s2, %s38
          %s448 = sshll.u32 %s446, 4
          %s449 = int_to_ptr.hbm [resolvable:$true] %s448
          %s450 = sshll.u32 %s443, 4
          %s451 = int_to_ptr.vmem [resolvable:$true] %s450
          %453 = dma.hbm_to_vmem [thread:$0]  %s449, 16, %s451, %s441
        $region28: #{tpu_custom_call.1} parent=15 // pred_fallthru
          _
        // Predicated region
        $region29: #{tpu_custom_call.1} parent=15 // pred_check
          %p454 = pneg %p140
        $region30: #{tpu_custom_call.1} parent=15 // pred_check_branch
          %456 = sbr.rel (%p454) target = $region32
        $region31: #{tpu_custom_call.1} parent=15 // pred_region
          %p457 = scmp.lt.s32.totalorder %s38, 1
          %s458 = scalar_select %p457, %s38, 1
          %s459 = scalar_lea.vmem %s3, %s458
        $region32: #{tpu_custom_call.1} parent=15 // pred_fallthru
          _
        // Predicated region
        $region33: #{tpu_custom_call.1} parent=15 // pred_check
          %p460 = pneg %p166
        $region34: #{tpu_custom_call.1} parent=15 // pred_check_branch
          %462 = sbr.rel (%p460) target = $region36
        $region35: #{tpu_custom_call.1} parent=15 // pred_region
          %p463 = scmp.lt.s32.totalorder %s38, 1
          %s464 = scalar_select %p463, %s38, 1
          %s465 = smul.addr %s464, 4
          %s466 = smul.addr %s465, 8
          %s467 = scalar_lea.vmem %s4, %s466
        $region36: #{tpu_custom_call.1} parent=15 // pred_fallthru
          _
        // Predicated region
        $region37: #{tpu_custom_call.1} parent=15 // pred_check
          %p468 = pneg %p192
        $region38: #{tpu_custom_call.1} parent=15 // pred_check_branch
          %470 = sbr.rel (%p468) target = $region40
        $region39: #{tpu_custom_call.1} parent=15 // pred_region
          %p471 = scmp.lt.s32.totalorder %s38, 1
          %s472 = scalar_select %p471, %s38, 1
          %s473 = smul.addr %s472, 4
          %s474 = smul.addr %s473, 8
          %s475 = scalar_lea.vmem %s5, %s474
        $region40: #{tpu_custom_call.1} parent=15 // pred_fallthru
          _
        // Predicated region
        $region41: #{tpu_custom_call.1} parent=15 // pred_check
          %p476 = pneg %p218
        $region42: #{tpu_custom_call.1} parent=15 // pred_check_branch
          %478 = sbr.rel (%p476) target = $region44
        $region43: #{tpu_custom_call.1} parent=15 // pred_region
          %p479 = scmp.lt.s32.totalorder %s38, 1
          %s480 = scalar_select %p479, %s38, 1
          %s481 = scalar_lea.vmem %s6, %s480
        $region44: #{tpu_custom_call.1} parent=15 // pred_fallthru
          _
        // Predicated region
        $region45: #{tpu_custom_call.1} parent=15 // pred_check
          %p482 = pneg %p244
        $region46: #{tpu_custom_call.1} parent=15 // pred_check_branch
          %484 = sbr.rel (%p482) target = $region48
        $region47: #{tpu_custom_call.1} parent=15 // pred_region
          %s485 = sand.u32 %s234, 1
          %s486 = scalar_lea.sflag [#allocation9], %s485
          %s487 = sand.u32 %s234, 1
          %s488 = scalar_lea.vmem [#allocation8], %s487
          %490 = vsyncadd %s486, 0
          %s491 = scalar_lea.hbm %s7, %s38
          %s493 = sshll.u32 %s491, 4
          %s494 = int_to_ptr.hbm [resolvable:$true] %s493
          %s495 = sshll.u32 %s488, 4
          %s496 = int_to_ptr.vmem [resolvable:$true] %s495
          %498 = dma.hbm_to_vmem [thread:$0]  %s494, 16, %s496, %s486
        $region48: #{tpu_custom_call.1} parent=15 // pred_fallthru
          _
        // Predicated region
        $region49: #{tpu_custom_call.1} parent=15 // pred_check
          %p499 = pneg %p270
        $region50: #{tpu_custom_call.1} parent=15 // pred_check_branch
          %501 = sbr.rel (%p499) target = $region52
        $region51: #{tpu_custom_call.1} parent=15 // pred_region
          %p502 = scmp.lt.s32.totalorder %s38, 1
          %s503 = scalar_select %p502, %s38, 1
          %s504 = smul.addr %s503, 4
          %s505 = smul.addr %s504, 8
          %s506 = scalar_lea.vmem %s8, %s505
        $region52: #{tpu_custom_call.1} parent=15 // pred_fallthru
          _
        // Predicated region
        $region53: #{tpu_custom_call.1} parent=15 // pred_check
          %p507 = pneg %p296
        $region54: #{tpu_custom_call.1} parent=15 // pred_check_branch
          %509 = sbr.rel (%p507) target = $region56
        $region55: #{tpu_custom_call.1} parent=15 // pred_region
          %p510 = scmp.lt.s32.totalorder %s38, 1
          %s511 = scalar_select %p510, %s38, 1
          %s512 = scalar_lea.vmem %s9, %s511
        $region56: #{tpu_custom_call.1} parent=15 // pred_fallthru
          _
        // Predicated region
        $region57: #{tpu_custom_call.1} parent=15 // pred_check
          %p513 = pneg %p322
        $region58: #{tpu_custom_call.1} parent=15 // pred_check_branch
          %515 = sbr.rel (%p513) target = $region60
        $region59: #{tpu_custom_call.1} parent=15 // pred_region
          %p516 = scmp.lt.s32.totalorder %s38, 1
          %s517 = scalar_select %p516, %s38, 1
          %s518 = smul.addr %s517, 8
          %s519 = smul.addr %s518, 8
          %s520 = scalar_lea.vmem %s10, %s519
        $region60: #{tpu_custom_call.1} parent=15 // pred_fallthru
          _
        // Predicated region
        $region61: #{tpu_custom_call.1} parent=15 // pred_check
          %p521 = pneg %p348
        $region62: #{tpu_custom_call.1} parent=15 // pred_check_branch
          %523 = sbr.rel (%p521) target = $region64
        $region63: #{tpu_custom_call.1} parent=15 // pred_region
          %p524 = scmp.lt.s32.totalorder %s38, 1
          %s525 = scalar_select %p524, %s38, 1
          %s526 = scalar_lea.vmem %s11, %s525
        $region64: #{tpu_custom_call.1} parent=15 // pred_fallthru
          _
      $region16: #{tpu_custom_call.1} parent=5 // pred_fallthru
        _
      %p527 = scmp.le.s32.totalorder 1, %s30
      %p528 = scmp.lt.s32.totalorder %s30, 5
      %p529 = pnand %p527, %p528
      %p530 = pneg %p529
      // Predicated region
      $region65: #{tpu_custom_call.1} parent=5 // pred_check
        _
      $region66: #{tpu_custom_call.1} parent=5 // pred_check_branch
        %532 = sbr.rel (%p529) target = $region68
      $region67: #{tpu_custom_call.1} parent=5 // pred_region
        %s533 = ssub.s32 %s30, 1
        %s534 = sand.u32 %s55, 1
        %s535 = scalar_lea.sflag [#allocation3], %s534
        %s536 = sand.u32 %s55, 1
        %s537 = smul.addr %s536, 8
        %s538 = scalar_lea.vmem [#allocation2], %s537
        // Predicated region
        $region69: #{tpu_custom_call.1} parent=67 // pred_check
          %p539 = pneg %p68
        $region70: #{tpu_custom_call.1} parent=67 // pred_check_branch
          %541 = sbr.rel (%p539) target = $region72
        $region71: #{tpu_custom_call.1} parent=67 // pred_region
          %543 = dma.done %s535, 128
        $region72: #{tpu_custom_call.1} parent=67 // pred_fallthru
          _
        %s544 = sand.u32 %s35, 1
        %s545 = scalar_lea.sflag [#allocation6], %s544
        %s546 = sand.u32 %s81, 1
        %s547 = smul.addr %s546, 8
        %s548 = scalar_lea.vmem [#allocation5], %s547
        // Predicated region
        $region73: #{tpu_custom_call.1} parent=67 // pred_check
          %p549 = pneg %p94
        $region74: #{tpu_custom_call.1} parent=67 // pred_check_branch
          %551 = sbr.rel (%p549) target = $region76
        $region75: #{tpu_custom_call.1} parent=67 // pred_region
          %553 = dma.done %s545, 128
        $region76: #{tpu_custom_call.1} parent=67 // pred_fallthru
          _
        %s554 = sand.u32 %s35, 1
        %s555 = scalar_lea.sflag [#allocation6], %s554
        %s556 = sand.u32 %s107, 1
        %s557 = scalar_lea.vmem [#allocation7], %s556
        // Predicated region
        $region77: #{tpu_custom_call.1} parent=67 // pred_check
          %p558 = pneg %p120
        $region78: #{tpu_custom_call.1} parent=67 // pred_check_branch
          %560 = sbr.rel (%p558) target = $region80
        $region79: #{tpu_custom_call.1} parent=67 // pred_region
          %562 = dma.done %s555, 16
        $region80: #{tpu_custom_call.1} parent=67 // pred_fallthru
          _
        %s563 = sand.u32 %s237, 1
        %s564 = scalar_lea.sflag [#allocation9], %s563
        %s565 = sand.u32 %s237, 1
        %s566 = scalar_lea.vmem [#allocation8], %s565
        // Predicated region
        $region81: #{tpu_custom_call.1} parent=67 // pred_check
          %p567 = pneg %p250
        $region82: #{tpu_custom_call.1} parent=67 // pred_check_branch
          %569 = sbr.rel (%p567) target = $region84
        $region83: #{tpu_custom_call.1} parent=67 // pred_region
          %571 = dma.done %s564, 16
        $region84: #{tpu_custom_call.1} parent=67 // pred_fallthru
          _
        %s572 = sand.u32 %s55, 1
        %s573 = scalar_lea.sflag [#allocation3], %s572
        %s574 = sand.u32 %s55, 1
        %s575 = smul.addr %s574, 8
        %s576 = scalar_lea.vmem [#allocation2], %s575
        %p577 = pneg %p68
        %p578 = pneg %p65
        %s579 = sand.u32 %s35, 1
        %s580 = scalar_lea.sflag [#allocation6], %s579
        %s581 = sand.u32 %s81, 1
        %s582 = smul.addr %s581, 8
        %s583 = scalar_lea.vmem [#allocation5], %s582
        %p584 = pneg %p94
        %p585 = pneg %p91
        %s586 = sand.u32 %s35, 1
        %s587 = scalar_lea.sflag [#allocation6], %s586
        %s588 = sand.u32 %s107, 1
        %s589 = scalar_lea.vmem [#allocation7], %s588
        %p590 = pneg %p120
        %p591 = pneg %p117
        %p592 = scmp.lt.s32.totalorder %s40, 1
        %s593 = scalar_select %p592, %s40, 1
        %s594 = scalar_lea.vmem %s3, %s593
        %p595 = pneg %p146
        %p596 = pneg %p143
        %p597 = scmp.lt.s32.totalorder %s40, 1
        %s598 = scalar_select %p597, %s40, 1
        %s599 = smul.addr %s598, 4
        %s600 = smul.addr %s599, 8
        %s601 = scalar_lea.vmem %s4, %s600
        %p602 = pneg %p172
        %p603 = pneg %p169
        %p604 = scmp.lt.s32.totalorder %s40, 1
        %s605 = scalar_select %p604, %s40, 1
        %s606 = smul.addr %s605, 4
        %s607 = smul.addr %s606, 8
        %s608 = scalar_lea.vmem %s5, %s607
        %p609 = pneg %p198
        %p610 = pneg %p195
        %p611 = scmp.lt.s32.totalorder %s40, 1
        %s612 = scalar_select %p611, %s40, 1
        %s613 = scalar_lea.vmem %s6, %s612
        %p614 = pneg %p224
        %p615 = pneg %p221
        %s616 = sand.u32 %s237, 1
        %s617 = scalar_lea.sflag [#allocation9], %s616
        %s618 = sand.u32 %s237, 1
        %s619 = scalar_lea.vmem [#allocation8], %s618
        %p620 = pneg %p250
        %p621 = pneg %p247
        %p622 = scmp.lt.s32.totalorder %s40, 1
        %s623 = scalar_select %p622, %s40, 1
        %s624 = smul.addr %s623, 4
        %s625 = smul.addr %s624, 8
        %s626 = scalar_lea.vmem %s8, %s625
        %p627 = pneg %p276
        %p628 = pneg %p273
        %p629 = scmp.lt.s32.totalorder %s40, 1
        %s630 = scalar_select %p629, %s40, 1
        %s631 = scalar_lea.vmem %s9, %s630
        %p632 = pneg %p302
        %p633 = pneg %p299
        %p634 = scmp.lt.s32.totalorder %s40, 1
        %s635 = scalar_select %p634, %s40, 1
        %s636 = smul.addr %s635, 8
        %s637 = smul.addr %s636, 8
        %s638 = scalar_lea.vmem %s10, %s637
        %p639 = pneg %p328
        %p640 = pneg %p325
        %p641 = scmp.lt.s32.totalorder %s40, 1
        %s642 = scalar_select %p641, %s40, 1
        %s643 = scalar_lea.vmem %s11, %s642
        %p644 = pneg %p354
        %p645 = pneg %p351
        %p646 = pneg %p380
        %p647 = pneg %p377
        %s648 = sand.u32 %s367, 1
        %s649 = scalar_lea.sflag [#allocation4], %s648
        %s650 = sand.u32 %s367, 1
        %s651 = smul.addr %s650, 8
        %s652 = scalar_lea.vmem [#allocation10], %s651
        %p653 = scmp.lt.s32.totalorder %s40, 1
        %s654 = scalar_select %p653, %s40, 1
        %s655 = scalar_lea.vmem %s3, %s654
        %p656 = scmp.lt.s32.totalorder %s40, 1
        %s657 = scalar_select %p656, %s40, 1
        %s658 = smul.addr %s657, 4
        %s659 = smul.addr %s658, 8
        %s660 = scalar_lea.vmem %s4, %s659
        %p661 = scmp.lt.s32.totalorder %s40, 1
        %s662 = scalar_select %p661, %s40, 1
        %s663 = smul.addr %s662, 4
        %s664 = smul.addr %s663, 8
        %s665 = scalar_lea.vmem %s5, %s664
        %p666 = scmp.lt.s32.totalorder %s40, 1
        %s667 = scalar_select %p666, %s40, 1
        %s668 = scalar_lea.vmem %s6, %s667
        %p669 = scmp.lt.s32.totalorder %s40, 1
        %s670 = scalar_select %p669, %s40, 1
        %s671 = smul.addr %s670, 4
        %s672 = smul.addr %s671, 8
        %s673 = scalar_lea.vmem %s8, %s672
        %p674 = scmp.lt.s32.totalorder %s40, 1
        %s675 = scalar_select %p674, %s40, 1
        %s676 = scalar_lea.vmem %s9, %s675
        %p677 = scmp.lt.s32.totalorder %s40, 1
        %s678 = scalar_select %p677, %s40, 1
        %s679 = smul.addr %s678, 8
        %s680 = smul.addr %s679, 8
        %s681 = scalar_lea.vmem %s10, %s680
        %p682 = scmp.lt.s32.totalorder %s40, 1
        %s683 = scalar_select %p682, %s40, 1
        %s684 = scalar_lea.vmem %s11, %s683
        %p685 = scmp.eq.s32.totalorder %s40, 0
        // Predicated region
        $region85: #{tpu_custom_call.1} parent=67 // pred_check
          %p686 = pneg %p685
        $region86: #{tpu_custom_call.1} parent=67 // pred_check_branch
          %688 = sbr.rel (%p686) target = $region88
        $region87: #{tpu_custom_call.1} parent=67 // pred_region
          %v689 = vld [vmem:[%s538] sm:$0xff]
          %vm690 = vcmask 261120
          %691 = vst.msk [vmem:[%s652] sm:$0xff] %vm690, %v689
        $region88: #{tpu_custom_call.1} parent=67 // pred_fallthru
          _
        %v692 = vld [vmem:[%s652] sm:$0xff]
        %v693 = vld [vmem:[%s548] sm:$0xff]
        %v694 = vld [vmem:[%s557] sm:$0x1]
        %v695 = vld [vmem:[%s655] sm:$0x1]
        %vm696 = vcmask 261120
        %v697 = vsel %vm696, %v692, 0.0
        %698 = vadd.xlane.f32.xlu0 %v697
        %v699 = vpop.xlane.xlu0 %698
        %v700 = vrcp.pop 32.0
        %v701 = vmul.f32 32.0, %v700
        %v702 = vsub.f32 1.0, %v701
        %v703 = vmul.f32 %v700, %v702
        %v704 = vadd.f32 %v700, %v703
        %vm705 = vweird.f32 %v700
        %v706 = vsel %vm705, %v700, %v704
        %v707 = vmul.f32 %v699, %v706
        %v708 = vmul.f32 %v692, %v692
        %v709 = vsel %vm696, %v708, 0.0
        %710 = vadd.xlane.f32.xlu0 %v709
        %v711 = vpop.xlane.xlu0 %710
        %v712 = vmul.f32 %v711, %v706
        %v713 = vmul.f32 %v707, %v707
        %v714 = vsub.f32 %v712, %v713
        %v715 = vsub.f32 %v692, %v707
        %v716 = vadd.f32 %v714, 1e-05
        %v717 = vrsqrt.pop %v716
        %v718 = vmul.f32 %v717, %v716
        %v719 = vmul.f32 %v718, %v717
        %v720 = vmul.f32 0.5, %v719
        %v721 = vsub.f32 1.5, %v720
        %v722 = vmul.f32 %v717, %v721
        %vm723 = vweird.f32 %v716
        %vm724 = vweird.f32 %v717
        %vm725 = vmor %vm723, %vm724
        %v726 = vsel %vm725, %v717, %v722
        %v727 = vmul.f32 %v715, %v726
        %v729 = vperm.slane %v694, 0
        %v731 = vmul.f32 %v727, %v729
        %v733 = vperm.slane %v695, 0
        %v735 = vadd.f32 %v731, %v733
        %v736 = vld [vmem:[%s660] sm:$0xff]
        %v737 = vld [vmem:[%s660 + $0x8] sm:$0xff]
        %v738 = vld [vmem:[%s660 + $0x10] sm:$0xff]
        %v739 = vld [vmem:[%s660 + $0x18] sm:$0xff]
        %v741 = vsel %vm696, %v735, 0
        %743 = vmatpush.msra.mxu0 0.0
        %744 = vmatpush.msra.mxu0 0.0
        %745 = vmatpush.msra.mxu0 0.0
        %746 = vmatpush.msra.mxu0 0.0
        %747 = vmatpush.msra.mxu0 0.0
        %748 = vmatpush.msra.mxu0 0.0
        %749 = vmatpush.msra.mxu0 0.0
        %750 = vmatpush.msra.mxu0 0.0
        %751 = vmatpush.msra.mxu0 0.0
        %752 = vmatpush.msra.mxu0 0.0
        %753 = vmatpush.msra.mxu0 0.0
        %754 = vmatpush.msra.mxu0 0.0
        %755 = vmatpush.msra.mxu0 %v739
        %756 = vmatpush.msra.mxu0 %v738
        %757 = vmatpush.msra.mxu0 %v737
        %758 = vmatpush.msra.mxu0 %v736
        %759 = vmatmul.f32.gmra.mxu0 %v741
        %v760 = vpop.f32.mrf.mxu0
        %v761 = vadd.f32 0.0, %v760
        %762 = vdwg.mxu0
        %764 = vrot.lane.b32.xlu0 %v761, 120
        %v765 = vpop.permute.xlu0 %764
        %767 = vrot.lane.b32.xlu0 %v761, 112
        %v768 = vpop.permute.xlu0 %767
        %770 = vrot.lane.b32.xlu0 %v761, 104
        %v771 = vpop.permute.xlu0 %770
        %v773 = vrot.slane %v768, 4
        %vm774 = vcmask 1047556
        %v775 = vsel %vm774, %v773, %v761
        %v776 = vrot.slane %v761, 4
        %v777 = vsel %vm774, %v768, %v776
        %v779 = vunpack.c.l.s4 1983009808
        %v780 = vunpack.c.0.s8 %v779
        %v781 = vperm.slane %v775, %v780
        %v783 = vunpack.c.l.s4 1983009808
        %v784 = vunpack.c.0.s8 %v783
        %v785 = vperm.slane %v777, %v784
        %v786 = vrot.slane %v771, 4
        %v787 = vsel %vm774, %v786, %v765
        %v788 = vrot.slane %v765, 4
        %v789 = vsel %vm774, %v771, %v788
        %v791 = vunpack.c.l.s4 1983009808
        %v792 = vunpack.c.0.s8 %v791
        %v793 = vperm.slane %v787, %v792
        %v795 = vunpack.c.l.s4 1983009808
        %v796 = vunpack.c.0.s8 %v795
        %v797 = vperm.slane %v789, %v796
        %v798 = vrot.slane %v793, 4
        %v799 = vsel %vm774, %v798, %v781
        %v800 = vrot.slane %v781, 4
        %v801 = vsel %vm774, %v793, %v800
        %v803 = vunpack.c.l.s4 1934713408
        %v804 = vunpack.c.0.s8 %v803
        %v805 = vperm.slane %v799, %v804
        %v807 = vunpack.c.l.s4 1934713408
        %v808 = vunpack.c.0.s8 %v807
        %v809 = vperm.slane %v801, %v808
        %v810 = vrot.slane %v797, 4
        %v811 = vsel %vm774, %v810, %v785
        %v812 = vrot.slane %v785, 4
        %v813 = vsel %vm774, %v797, %v812
        %v815 = vunpack.c.l.s4 1934713408
        %v816 = vunpack.c.0.s8 %v815
        %v817 = vperm.slane %v811, %v816
        %v819 = vunpack.c.l.s4 1934713408
        %v820 = vunpack.c.0.s8 %v819
        %v821 = vperm.slane %v813, %v820
        %v822 = vrot.slane %v805, 4
        %v823 = vsel %vm774, 0.0, %v822
        %v824 = vrot.slane %v809, 4
        %v825 = vsel %vm774, 0.0, %v824
        %v826 = vrot.slane %v817, 4
        %v827 = vsel %vm774, 0.0, %v826
        %v828 = vrot.slane %v821, 4
        %v829 = vsel %vm774, 0.0, %v828
        %v830 = vsel %vm774, %v824, %v805
        %v832 = vunpack.c.l.s4 1983009808
        %v833 = vunpack.c.0.s8 %v832
        %v834 = vperm.slane %v830, %v833
        %v835 = vrot.slane %v825, 4
        %v836 = vsel %vm774, %v835, %v823
        %v838 = vunpack.c.l.s4 1983009808
        %v839 = vunpack.c.0.s8 %v838
        %v840 = vperm.slane %v836, %v839
        %v841 = vsel %vm774, %v828, %v817
        %v843 = vunpack.c.l.s4 1983009808
        %v844 = vunpack.c.0.s8 %v843
        %v845 = vperm.slane %v841, %v844
        %v846 = vrot.slane %v829, 4
        %v847 = vsel %vm774, %v846, %v827
        %v849 = vunpack.c.l.s4 1983009808
        %v850 = vunpack.c.0.s8 %v849
        %v851 = vperm.slane %v847, %v850
        %v852 = vrot.slane %v840, 4
        %v853 = vsel %vm774, %v852, %v834
        %v854 = vrot.slane %v834, 4
        %v855 = vsel %vm774, %v840, %v854
        %v857 = vunpack.c.l.s4 1934713408
        %v858 = vunpack.c.0.s8 %v857
        %v859 = vperm.slane %v853, %v858
        %v861 = vunpack.c.l.s4 1934713408
        %v862 = vunpack.c.0.s8 %v861
        %v863 = vperm.slane %v855, %v862
        %v864 = vrot.slane %v851, 4
        %v865 = vsel %vm774, %v864, %v845
        %v866 = vrot.slane %v845, 4
        %v867 = vsel %vm774, %v851, %v866
        %v869 = vunpack.c.l.s4 1934713408
        %v870 = vunpack.c.0.s8 %v869
        %v871 = vperm.slane %v865, %v870
        %v873 = vunpack.c.l.s4 1934713408
        %v874 = vunpack.c.0.s8 %v873
        %v875 = vperm.slane %v867, %v874
        %v876 = vrot.slane %v871, 4
        %v877 = vsel %vm774, %v876, %v859
        %v878 = vrot.slane %v859, 4
        %v879 = vsel %vm774, %v871, %v878
        %v880 = vrot.slane %v875, 4
        %v881 = vsel %vm774, %v880, %v863
        %v882 = vrot.slane %v863, 4
        %v883 = vsel %vm774, %v875, %v882
        %884 = vrot.lane.b32.xlu0 %v761, 96
        %v885 = vpop.permute.xlu0 %884
        %886 = vrot.lane.b32.xlu0 %v765, 96
        %v887 = vpop.permute.xlu0 %886
        %888 = vrot.lane.b32.xlu0 %v768, 96
        %v889 = vpop.permute.xlu0 %888
        %890 = vrot.lane.b32.xlu0 %v771, 96
        %v891 = vpop.permute.xlu0 %890
        %v896 = vrot.slane %v889, 4
        %v897 = vsel %vm774, %v896, %v885
        %v898 = vrot.slane %v885, 4
        %v899 = vsel %vm774, %v889, %v898
        %v901 = vunpack.c.l.s4 1983009808
        %v902 = vunpack.c.0.s8 %v901
        %v903 = vperm.slane %v897, %v902
        %v905 = vunpack.c.l.s4 1983009808
        %v906 = vunpack.c.0.s8 %v905
        %v907 = vperm.slane %v899, %v906
        %v908 = vrot.slane %v891, 4
        %v909 = vsel %vm774, %v908, %v887
        %v910 = vrot.slane %v887, 4
        %v911 = vsel %vm774, %v891, %v910
        %v913 = vunpack.c.l.s4 1983009808
        %v914 = vunpack.c.0.s8 %v913
        %v915 = vperm.slane %v909, %v914
        %v917 = vunpack.c.l.s4 1983009808
        %v918 = vunpack.c.0.s8 %v917
        %v919 = vperm.slane %v911, %v918
        %v920 = vrot.slane %v915, 4
        %v921 = vsel %vm774, %v920, %v903
        %v922 = vrot.slane %v903, 4
        %v923 = vsel %vm774, %v915, %v922
        %v925 = vunpack.c.l.s4 1934713408
        %v926 = vunpack.c.0.s8 %v925
        %v927 = vperm.slane %v921, %v926
        %v929 = vunpack.c.l.s4 1934713408
        %v930 = vunpack.c.0.s8 %v929
        %v931 = vperm.slane %v923, %v930
        %v932 = vrot.slane %v919, 4
        %v933 = vsel %vm774, %v932, %v907
        %v934 = vrot.slane %v907, 4
        %v935 = vsel %vm774, %v919, %v934
        %v937 = vunpack.c.l.s4 1934713408
        %v938 = vunpack.c.0.s8 %v937
        %v939 = vperm.slane %v933, %v938
        %v941 = vunpack.c.l.s4 1934713408
        %v942 = vunpack.c.0.s8 %v941
        %v943 = vperm.slane %v935, %v942
        %v944 = vrot.slane %v927, 4
        %v945 = vsel %vm774, 0.0, %v944
        %v946 = vrot.slane %v931, 4
        %v947 = vsel %vm774, 0.0, %v946
        %v948 = vrot.slane %v939, 4
        %v949 = vsel %vm774, 0.0, %v948
        %v950 = vrot.slane %v943, 4
        %v951 = vsel %vm774, 0.0, %v950
        %v952 = vsel %vm774, %v946, %v927
        %v954 = vunpack.c.l.s4 1983009808
        %v955 = vunpack.c.0.s8 %v954
        %v956 = vperm.slane %v952, %v955
        %v957 = vrot.slane %v947, 4
        %v958 = vsel %vm774, %v957, %v945
        %v960 = vunpack.c.l.s4 1983009808
        %v961 = vunpack.c.0.s8 %v960
        %v962 = vperm.slane %v958, %v961
        %v963 = vsel %vm774, %v950, %v939
        %v965 = vunpack.c.l.s4 1983009808
        %v966 = vunpack.c.0.s8 %v965
        %v967 = vperm.slane %v963, %v966
        %v968 = vrot.slane %v951, 4
        %v969 = vsel %vm774, %v968, %v949
        %v971 = vunpack.c.l.s4 1983009808
        %v972 = vunpack.c.0.s8 %v971
        %v973 = vperm.slane %v969, %v972
        %v974 = vrot.slane %v962, 4
        %v975 = vsel %vm774, %v974, %v956
        %v976 = vrot.slane %v956, 4
        %v977 = vsel %vm774, %v962, %v976
        %v979 = vunpack.c.l.s4 1934713408
        %v980 = vunpack.c.0.s8 %v979
        %v981 = vperm.slane %v975, %v980
        %v983 = vunpack.c.l.s4 1934713408
        %v984 = vunpack.c.0.s8 %v983
        %v985 = vperm.slane %v977, %v984
        %v986 = vrot.slane %v973, 4
        %v987 = vsel %vm774, %v986, %v967
        %v988 = vrot.slane %v967, 4
        %v989 = vsel %vm774, %v973, %v988
        %v991 = vunpack.c.l.s4 1934713408
        %v992 = vunpack.c.0.s8 %v991
        %v993 = vperm.slane %v987, %v992
        %v995 = vunpack.c.l.s4 1934713408
        %v996 = vunpack.c.0.s8 %v995
        %v997 = vperm.slane %v989, %v996
        %v998 = vrot.slane %v993, 4
        %v999 = vsel %vm774, %v998, %v981
        %v1000 = vrot.slane %v981, 4
        %v1001 = vsel %vm774, %v993, %v1000
        %v1002 = vrot.slane %v997, 4
        %v1003 = vsel %vm774, %v1002, %v985
        %v1004 = vrot.slane %v985, 4
        %v1005 = vsel %vm774, %v997, %v1004
        %1006 = vrot.lane.b32.xlu0 %v761, 64
        %v1007 = vpop.permute.xlu0 %1006
        %1008 = vrot.lane.b32.xlu0 %v765, 64
        %v1009 = vpop.permute.xlu0 %1008
        %1010 = vrot.lane.b32.xlu0 %v768, 64
        %v1011 = vpop.permute.xlu0 %1010
        %1012 = vrot.lane.b32.xlu0 %v771, 64
        %v1013 = vpop.permute.xlu0 %1012
        %v1018 = vrot.slane %v1011, 4
        %v1019 = vsel %vm774, %v1018, %v1007
        %v1020 = vrot.slane %v1007, 4
        %v1021 = vsel %vm774, %v1011, %v1020
        %v1023 = vunpack.c.l.s4 1983009808
        %v1024 = vunpack.c.0.s8 %v1023
        %v1025 = vperm.slane %v1019, %v1024
        %v1027 = vunpack.c.l.s4 1983009808
        %v1028 = vunpack.c.0.s8 %v1027
        %v1029 = vperm.slane %v1021, %v1028
        %v1030 = vrot.slane %v1013, 4
        %v1031 = vsel %vm774, %v1030, %v1009
        %v1032 = vrot.slane %v1009, 4
        %v1033 = vsel %vm774, %v1013, %v1032
        %v1035 = vunpack.c.l.s4 1983009808
        %v1036 = vunpack.c.0.s8 %v1035
        %v1037 = vperm.slane %v1031, %v1036
        %v1039 = vunpack.c.l.s4 1983009808
        %v1040 = vunpack.c.0.s8 %v1039
        %v1041 = vperm.slane %v1033, %v1040
        %v1042 = vrot.slane %v1037, 4
        %v1043 = vsel %vm774, %v1042, %v1025
        %v1044 = vrot.slane %v1025, 4
        %v1045 = vsel %vm774, %v1037, %v1044
        %v1047 = vunpack.c.l.s4 1934713408
        %v1048 = vunpack.c.0.s8 %v1047
        %v1049 = vperm.slane %v1043, %v1048
        %v1051 = vunpack.c.l.s4 1934713408
        %v1052 = vunpack.c.0.s8 %v1051
        %v1053 = vperm.slane %v1045, %v1052
        %v1054 = vrot.slane %v1041, 4
        %v1055 = vsel %vm774, %v1054, %v1029
        %v1056 = vrot.slane %v1029, 4
        %v1057 = vsel %vm774, %v1041, %v1056
        %v1059 = vunpack.c.l.s4 1934713408
        %v1060 = vunpack.c.0.s8 %v1059
        %v1061 = vperm.slane %v1055, %v1060
        %v1063 = vunpack.c.l.s4 1934713408
        %v1064 = vunpack.c.0.s8 %v1063
        %v1065 = vperm.slane %v1057, %v1064
        %v1066 = vrot.slane %v1049, 4
        %v1067 = vsel %vm774, 0.0, %v1066
        %v1068 = vrot.slane %v1053, 4
        %v1069 = vsel %vm774, 0.0, %v1068
        %v1070 = vrot.slane %v1061, 4
        %v1071 = vsel %vm774, 0.0, %v1070
        %v1072 = vrot.slane %v1065, 4
        %v1073 = vsel %vm774, 0.0, %v1072
        %v1074 = vsel %vm774, %v1068, %v1049
        %v1076 = vunpack.c.l.s4 1983009808
        %v1077 = vunpack.c.0.s8 %v1076
        %v1078 = vperm.slane %v1074, %v1077
        %v1079 = vrot.slane %v1069, 4
        %v1080 = vsel %vm774, %v1079, %v1067
        %v1082 = vunpack.c.l.s4 1983009808
        %v1083 = vunpack.c.0.s8 %v1082
        %v1084 = vperm.slane %v1080, %v1083
        %v1085 = vsel %vm774, %v1072, %v1061
        %v1087 = vunpack.c.l.s4 1983009808
        %v1088 = vunpack.c.0.s8 %v1087
        %v1089 = vperm.slane %v1085, %v1088
        %v1090 = vrot.slane %v1073, 4
        %v1091 = vsel %vm774, %v1090, %v1071
        %v1093 = vunpack.c.l.s4 1983009808
        %v1094 = vunpack.c.0.s8 %v1093
        %v1095 = vperm.slane %v1091, %v1094
        %v1096 = vrot.slane %v1084, 4
        %v1097 = vsel %vm774, %v1096, %v1078
        %v1098 = vrot.slane %v1078, 4
        %v1099 = vsel %vm774, %v1084, %v1098
        %v1101 = vunpack.c.l.s4 1934713408
        %v1102 = vunpack.c.0.s8 %v1101
        %v1103 = vperm.slane %v1097, %v1102
        %v1105 = vunpack.c.l.s4 1934713408
        %v1106 = vunpack.c.0.s8 %v1105
        %v1107 = vperm.slane %v1099, %v1106
        %v1108 = vrot.slane %v1095, 4
        %v1109 = vsel %vm774, %v1108, %v1089
        %v1110 = vrot.slane %v1089, 4
        %v1111 = vsel %vm774, %v1095, %v1110
        %v1113 = vunpack.c.l.s4 1934713408
        %v1114 = vunpack.c.0.s8 %v1113
        %v1115 = vperm.slane %v1109, %v1114
        %v1117 = vunpack.c.l.s4 1934713408
        %v1118 = vunpack.c.0.s8 %v1117
        %v1119 = vperm.slane %v1111, %v1118
        %v1120 = vrot.slane %v1115, 4
        %v1121 = vsel %vm774, %v1120, %v1103
        %v1122 = vrot.slane %v1103, 4
        %v1123 = vsel %vm774, %v1115, %v1122
        %v1124 = vrot.slane %v1119, 4
        %v1125 = vsel %vm774, %v1124, %v1107
        %v1126 = vrot.slane %v1107, 4
        %v1127 = vsel %vm774, %v1119, %v1126
        %vm1128 = vcmask 64512
        %v1130 = vsel %vm1128, %v877, 0
        %v1133 = vsel %vm1128, %v999, 0
        %1135 = vmatpush.xpose.msra.mxu0 0.0
        %1136 = vmatpush.xpose.msra.mxu0 0.0
        %1137 = vmatpush.xpose.msra.mxu0 0.0
        %1138 = vmatpush.xpose.msra.mxu0 0.0
        %1139 = vmatpush.xpose.msra.mxu0 0.0
        %1140 = vmatpush.xpose.msra.mxu0 0.0
        %1141 = vmatpush.xpose.msra.mxu0 0.0
        %1142 = vmatpush.xpose.msra.mxu0 0.0
        %1143 = vmatpush.xpose.msra.mxu0 0.0
        %1144 = vmatpush.xpose.msra.mxu0 0.0
        %1145 = vmatpush.xpose.msra.mxu0 0.0
        %1146 = vmatpush.xpose.msra.mxu0 0.0
        %1147 = vmatpush.xpose.msra.mxu0 0.0
        %1148 = vmatpush.xpose.msra.mxu0 0.0
        %1149 = vmatpush.xpose.msra.mxu0 0.0
        %1150 = vmatpush.xpose.msra.mxu0 %v1133
        %1151 = vmatmul.f32.gmra.mxu0 %v1130
        %v1152 = vpop.f32.mrf.mxu0
        %v1153 = vadd.f32 %v693, %v1152
        %1154 = vdwg.mxu0
        %v1156 = vsel %vm1128, %v879, 0
        %v1159 = vsel %vm1128, %v1001, 0
        %1161 = vmatpush.xpose.msra.mxu0 0.0
        %1162 = vmatpush.xpose.msra.mxu0 0.0
        %1163 = vmatpush.xpose.msra.mxu0 0.0
        %1164 = vmatpush.xpose.msra.mxu0 0.0
        %1165 = vmatpush.xpose.msra.mxu0 0.0
        %1166 = vmatpush.xpose.msra.mxu0 0.0
        %1167 = vmatpush.xpose.msra.mxu0 0.0
        %1168 = vmatpush.xpose.msra.mxu0 0.0
        %1169 = vmatpush.xpose.msra.mxu0 0.0
        %1170 = vmatpush.xpose.msra.mxu0 0.0
        %1171 = vmatpush.xpose.msra.mxu0 0.0
        %1172 = vmatpush.xpose.msra.mxu0 0.0
        %1173 = vmatpush.xpose.msra.mxu0 0.0
        %1174 = vmatpush.xpose.msra.mxu0 0.0
        %1175 = vmatpush.xpose.msra.mxu0 0.0
        %1176 = vmatpush.xpose.msra.mxu0 %v1159
        %1177 = vmatmul.f32.gmra.mxu0 %v1156
        %v1178 = vpop.f32.mrf.mxu0
        %v1179 = vadd.f32 %v693, %v1178
        %1180 = vdwg.mxu0
        %v1182 = vsel %vm1128, %v881, 0
        %v1185 = vsel %vm1128, %v1003, 0
        %1187 = vmatpush.xpose.msra.mxu0 0.0
        %1188 = vmatpush.xpose.msra.mxu0 0.0
        %1189 = vmatpush.xpose.msra.mxu0 0.0
        %1190 = vmatpush.xpose.msra.mxu0 0.0
        %1191 = vmatpush.xpose.msra.mxu0 0.0
        %1192 = vmatpush.xpose.msra.mxu0 0.0
        %1193 = vmatpush.xpose.msra.mxu0 0.0
        %1194 = vmatpush.xpose.msra.mxu0 0.0
        %1195 = vmatpush.xpose.msra.mxu0 0.0
        %1196 = vmatpush.xpose.msra.mxu0 0.0
        %1197 = vmatpush.xpose.msra.mxu0 0.0
        %1198 = vmatpush.xpose.msra.mxu0 0.0
        %1199 = vmatpush.xpose.msra.mxu0 0.0
        %1200 = vmatpush.xpose.msra.mxu0 0.0
        %1201 = vmatpush.xpose.msra.mxu0 0.0
        %1202 = vmatpush.xpose.msra.mxu0 %v1185
        %1203 = vmatmul.f32.gmra.mxu0 %v1182
        %v1204 = vpop.f32.mrf.mxu0
        %v1205 = vadd.f32 %v693, %v1204
        %1206 = vdwg.mxu0
        %v1208 = vsel %vm1128, %v883, 0
        %v1211 = vsel %vm1128, %v1005, 0
        %1213 = vmatpush.xpose.msra.mxu0 0.0
        %1214 = vmatpush.xpose.msra.mxu0 0.0
        %1215 = vmatpush.xpose.msra.mxu0 0.0
        %1216 = vmatpush.xpose.msra.mxu0 0.0
        %1217 = vmatpush.xpose.msra.mxu0 0.0
        %1218 = vmatpush.xpose.msra.mxu0 0.0
        %1219 = vmatpush.xpose.msra.mxu0 0.0
        %1220 = vmatpush.xpose.msra.mxu0 0.0
        %1221 = vmatpush.xpose.msra.mxu0 0.0
        %1222 = vmatpush.xpose.msra.mxu0 0.0
        %1223 = vmatpush.xpose.msra.mxu0 0.0
        %1224 = vmatpush.xpose.msra.mxu0 0.0
        %1225 = vmatpush.xpose.msra.mxu0 0.0
        %1226 = vmatpush.xpose.msra.mxu0 0.0
        %1227 = vmatpush.xpose.msra.mxu0 0.0
        %1228 = vmatpush.xpose.msra.mxu0 %v1211
        %1229 = vmatmul.f32.gmra.mxu0 %v1208
        %v1230 = vpop.f32.mrf.mxu0
        %v1231 = vadd.f32 %v693, %v1230
        %1232 = vdwg.mxu0
        %v1233 = vsel %vm1128, %v1153, -inf
        %1234 = vmax.xlane.f32.xlu0 %v1233
        %v1235 = vpop.xlane.xlu0 %1234
        %v1236 = vsel %vm1128, %v1179, -inf
        %1237 = vmax.xlane.f32.xlu0 %v1236
        %v1238 = vpop.xlane.xlu0 %1237
        %v1239 = vsel %vm1128, %v1205, -inf
        %1240 = vmax.xlane.f32.xlu0 %v1239
        %v1241 = vpop.xlane.xlu0 %1240
        %v1242 = vsel %vm1128, %v1231, -inf
        %1243 = vmax.xlane.f32.xlu0 %v1242
        %v1244 = vpop.xlane.xlu0 %1243
        %v1245 = vsub.f32 %v1153, %v1235
        %v1246 = vsub.f32 %v1179, %v1238
        %v1247 = vsub.f32 %v1205, %v1241
        %v1248 = vsub.f32 %v1231, %v1244
        %v1249 = vmul.f32 %v1245, 1.442695
        %v1250 = vpow.pop %v1249
        %v1251 = vmul.f32 %v1246, 1.442695
        %v1252 = vpow.pop %v1251
        %v1253 = vmul.f32 %v1247, 1.442695
        %v1254 = vpow.pop %v1253
        %v1255 = vmul.f32 %v1248, 1.442695
        %v1256 = vpow.pop %v1255
        %v1257 = vsel %vm1128, %v1250, 0.0
        %1258 = vadd.xlane.f32.xlu0 %v1257
        %v1259 = vpop.xlane.xlu0 %1258
        %v1260 = vsel %vm1128, %v1252, 0.0
        %1261 = vadd.xlane.f32.xlu0 %v1260
        %v1262 = vpop.xlane.xlu0 %1261
        %v1263 = vsel %vm1128, %v1254, 0.0
        %1264 = vadd.xlane.f32.xlu0 %v1263
        %v1265 = vpop.xlane.xlu0 %1264
        %v1266 = vsel %vm1128, %v1256, 0.0
        %1267 = vadd.xlane.f32.xlu0 %v1266
        %v1268 = vpop.xlane.xlu0 %1267
        %v1269 = vrcp.pop %v1259
        %v1270 = vrcp.pop %v1262
        %v1271 = vrcp.pop %v1265
        %v1272 = vrcp.pop %v1268
        %v1273 = vmul.f32 %v1259, %v1269
        %v1274 = vmul.f32 %v1262, %v1270
        %v1275 = vmul.f32 %v1265, %v1271
        %v1276 = vmul.f32 %v1268, %v1272
        %v1277 = vsub.f32 2.0, %v1273
        %v1278 = vsub.f32 2.0, %v1274
        %v1279 = vsub.f32 2.0, %v1275
        %v1280 = vsub.f32 2.0, %v1276
        %v1281 = vmul.f32 %v1269, %v1277
        %v1282 = vmul.f32 %v1270, %v1278
        %v1283 = vmul.f32 %v1271, %v1279
        %v1284 = vmul.f32 %v1272, %v1280
        %v1285 = vmul.f32 %v1250, %v1281
        %v1286 = vmul.f32 %v1252, %v1282
        %v1287 = vmul.f32 %v1254, %v1283
        %v1288 = vmul.f32 %v1256, %v1284
        %v1290 = vsel %vm1128, %v1285, 0
        %1292 = vmatpush.msra.mxu0 0.0
        %1293 = vmatpush.msra.mxu0 0.0
        %1294 = vmatpush.msra.mxu0 0.0
        %1295 = vmatpush.msra.mxu0 0.0
        %1296 = vmatpush.msra.mxu0 0.0
        %1297 = vmatpush.msra.mxu0 0.0
        %1298 = vmatpush.msra.mxu0 0.0
        %1299 = vmatpush.msra.mxu0 0.0
        %1300 = vmatpush.msra.mxu0 0.0
        %1301 = vmatpush.msra.mxu0 0.0
        %1302 = vmatpush.msra.mxu0 0.0
        %1303 = vmatpush.msra.mxu0 0.0
        %1304 = vmatpush.msra.mxu0 0.0
        %1305 = vmatpush.msra.mxu0 0.0
        %1306 = vmatpush.msra.mxu0 0.0
        %1307 = vmatpush.msra.mxu0 %v1121
        %1308 = vmatmul.f32.gmra.mxu0 %v1290
        %v1309 = vpop.f32.mrf.mxu0
        %v1310 = vadd.f32 0.0, %v1309
        %1311 = vdwg.mxu0
        %v1313 = vsel %vm1128, %v1286, 0
        %1315 = vmatpush.msra.mxu0 0.0
        %1316 = vmatpush.msra.mxu0 0.0
        %1317 = vmatpush.msra.mxu0 0.0
        %1318 = vmatpush.msra.mxu0 0.0
        %1319 = vmatpush.msra.mxu0 0.0
        %1320 = vmatpush.msra.mxu0 0.0
        %1321 = vmatpush.msra.mxu0 0.0
        %1322 = vmatpush.msra.mxu0 0.0
        %1323 = vmatpush.msra.mxu0 0.0
        %1324 = vmatpush.msra.mxu0 0.0
        %1325 = vmatpush.msra.mxu0 0.0
        %1326 = vmatpush.msra.mxu0 0.0
        %1327 = vmatpush.msra.mxu0 0.0
        %1328 = vmatpush.msra.mxu0 0.0
        %1329 = vmatpush.msra.mxu0 0.0
        %1330 = vmatpush.msra.mxu0 %v1123
        %1331 = vmatmul.f32.gmra.mxu0 %v1313
        %v1332 = vpop.f32.mrf.mxu0
        %v1333 = vadd.f32 0.0, %v1332
        %1334 = vdwg.mxu0
        %v1336 = vsel %vm1128, %v1287, 0
        %1338 = vmatpush.msra.mxu0 0.0
        %1339 = vmatpush.msra.mxu0 0.0
        %1340 = vmatpush.msra.mxu0 0.0
        %1341 = vmatpush.msra.mxu0 0.0
        %1342 = vmatpush.msra.mxu0 0.0
        %1343 = vmatpush.msra.mxu0 0.0
        %1344 = vmatpush.msra.mxu0 0.0
        %1345 = vmatpush.msra.mxu0 0.0
        %1346 = vmatpush.msra.mxu0 0.0
        %1347 = vmatpush.msra.mxu0 0.0
        %1348 = vmatpush.msra.mxu0 0.0
        %1349 = vmatpush.msra.mxu0 0.0
        %1350 = vmatpush.msra.mxu0 0.0
        %1351 = vmatpush.msra.mxu0 0.0
        %1352 = vmatpush.msra.mxu0 0.0
        %1353 = vmatpush.msra.mxu0 %v1125
        %1354 = vmatmul.f32.gmra.mxu0 %v1336
        %v1355 = vpop.f32.mrf.mxu0
        %v1356 = vadd.f32 0.0, %v1355
        %1357 = vdwg.mxu0
        %v1359 = vsel %vm1128, %v1288, 0
        %1361 = vmatpush.msra.mxu0 0.0
        %1362 = vmatpush.msra.mxu0 0.0
        %1363 = vmatpush.msra.mxu0 0.0
        %1364 = vmatpush.msra.mxu0 0.0
        %1365 = vmatpush.msra.mxu0 0.0
        %1366 = vmatpush.msra.mxu0 0.0
        %1367 = vmatpush.msra.mxu0 0.0
        %1368 = vmatpush.msra.mxu0 0.0
        %1369 = vmatpush.msra.mxu0 0.0
        %1370 = vmatpush.msra.mxu0 0.0
        %1371 = vmatpush.msra.mxu0 0.0
        %1372 = vmatpush.msra.mxu0 0.0
        %1373 = vmatpush.msra.mxu0 0.0
        %1374 = vmatpush.msra.mxu0 0.0
        %1375 = vmatpush.msra.mxu0 0.0
        %1376 = vmatpush.msra.mxu0 %v1127
        %1377 = vmatmul.f32.gmra.mxu0 %v1359
        %v1378 = vpop.f32.mrf.mxu0
        %v1379 = vadd.f32 0.0, %v1378
        %1380 = vdwg.mxu0
        %v1381 = vrot.slane %v1356, 4
        %v1382 = vsel %vm774, %v1381, %v1310
        %v1383 = vrot.slane %v1310, 4
        %v1384 = vsel %vm774, %v1356, %v1383
        %v1386 = vunpack.c.l.s4 1983009808
        %v1387 = vunpack.c.0.s8 %v1386
        %v1388 = vperm.slane %v1382, %v1387
        %v1390 = vunpack.c.l.s4 1983009808
        %v1391 = vunpack.c.0.s8 %v1390
        %v1392 = vperm.slane %v1384, %v1391
        %v1393 = vrot.slane %v1379, 4
        %v1394 = vsel %vm774, %v1393, %v1333
        %v1395 = vrot.slane %v1333, 4
        %v1396 = vsel %vm774, %v1379, %v1395
        %v1398 = vunpack.c.l.s4 1983009808
        %v1399 = vunpack.c.0.s8 %v1398
        %v1400 = vperm.slane %v1394, %v1399
        %v1402 = vunpack.c.l.s4 1983009808
        %v1403 = vunpack.c.0.s8 %v1402
        %v1404 = vperm.slane %v1396, %v1403
        %v1405 = vrot.slane %v1400, 4
        %v1406 = vsel %vm774, %v1405, %v1388
        %v1407 = vrot.slane %v1388, 4
        %v1408 = vsel %vm774, %v1400, %v1407
        %v1410 = vunpack.c.l.s4 1934713408
        %v1411 = vunpack.c.0.s8 %v1410
        %v1412 = vperm.slane %v1406, %v1411
        %v1414 = vunpack.c.l.s4 1934713408
        %v1415 = vunpack.c.0.s8 %v1414
        %v1416 = vperm.slane %v1408, %v1415
        %v1417 = vrot.slane %v1404, 4
        %v1418 = vsel %vm774, %v1417, %v1392
        %v1419 = vrot.slane %v1392, 4
        %v1420 = vsel %vm774, %v1404, %v1419
        %v1422 = vunpack.c.l.s4 1934713408
        %v1423 = vunpack.c.0.s8 %v1422
        %v1424 = vperm.slane %v1418, %v1423
        %v1426 = vunpack.c.l.s4 1934713408
        %v1427 = vunpack.c.0.s8 %v1426
        %v1428 = vperm.slane %v1420, %v1427
        %v1429 = vrot.slane %v1412, 4
        %v1430 = vsel %vm774, 0.0, %v1429
        %v1431 = vrot.slane %v1416, 4
        %v1432 = vsel %vm774, 0.0, %v1431
        %v1433 = vrot.slane %v1424, 4
        %v1434 = vsel %vm774, 0.0, %v1433
        %v1435 = vrot.slane %v1428, 4
        %v1436 = vsel %vm774, 0.0, %v1435
        %v1437 = vsel %vm774, %v1431, %v1412
        %v1439 = vunpack.c.l.s4 1983009808
        %v1440 = vunpack.c.0.s8 %v1439
        %v1441 = vperm.slane %v1437, %v1440
        %v1442 = vrot.slane %v1432, 4
        %v1443 = vsel %vm774, %v1442, %v1430
        %v1445 = vunpack.c.l.s4 1983009808
        %v1446 = vunpack.c.0.s8 %v1445
        %v1447 = vperm.slane %v1443, %v1446
        %v1448 = vsel %vm774, %v1435, %v1424
        %v1450 = vunpack.c.l.s4 1983009808
        %v1451 = vunpack.c.0.s8 %v1450
        %v1452 = vperm.slane %v1448, %v1451
        %v1453 = vrot.slane %v1436, 4
        %v1454 = vsel %vm774, %v1453, %v1434
        %v1456 = vunpack.c.l.s4 1983009808
        %v1457 = vunpack.c.0.s8 %v1456
        %v1458 = vperm.slane %v1454, %v1457
        %v1459 = vrot.slane %v1447, 4
        %v1460 = vsel %vm774, %v1459, %v1441
        %v1461 = vrot.slane %v1441, 4
        %v1462 = vsel %vm774, %v1447, %v1461
        %v1464 = vunpack.c.l.s4 1934713408
        %v1465 = vunpack.c.0.s8 %v1464
        %v1466 = vperm.slane %v1460, %v1465
        %v1468 = vunpack.c.l.s4 1934713408
        %v1469 = vunpack.c.0.s8 %v1468
        %v1470 = vperm.slane %v1462, %v1469
        %v1471 = vrot.slane %v1458, 4
        %v1472 = vsel %vm774, %v1471, %v1452
        %v1473 = vrot.slane %v1452, 4
        %v1474 = vsel %vm774, %v1458, %v1473
        %v1476 = vunpack.c.l.s4 1934713408
        %v1477 = vunpack.c.0.s8 %v1476
        %v1478 = vperm.slane %v1472, %v1477
        %v1480 = vunpack.c.l.s4 1934713408
        %v1481 = vunpack.c.0.s8 %v1480
        %v1482 = vperm.slane %v1474, %v1481
        %v1483 = vrot.slane %v1478, 4
        %v1484 = vsel %vm774, %v1483, %v1466
        %v1485 = vrot.slane %v1466, 4
        %v1486 = vsel %vm774, %v1478, %v1485
        %v1487 = vrot.slane %v1482, 4
        %v1488 = vsel %vm774, %v1487, %v1470
        %v1489 = vrot.slane %v1470, 4
        %v1490 = vsel %vm774, %v1482, %v1489
        %1492 = vrot.lane.b32.xlu0 %v1486, 8
        %v1493 = vpop.permute.xlu0 %1492
        %1496 = vrot.lane.b32.xlu0 %v1488, 16
        %v1497 = vpop.permute.xlu0 %1496
        %1500 = vrot.lane.b32.xlu0 %v1490, 24
        %v1501 = vpop.permute.xlu0 %1500
        %v1503 = vsel %vm1128, %v1484, %v1493
        %vm1504 = vcmask 130048
        %v1505 = vsel %vm1504, %v1503, %v1497
        %vm1506 = vcmask 195584
        %v1507 = vsel %vm1506, %v1505, %v1501
        %v1508 = vld [vmem:[%s665] sm:$0xff]
        %v1509 = vld [vmem:[%s665 + $0x8] sm:$0xff]
        %v1510 = vld [vmem:[%s665 + $0x10] sm:$0xff]
        %v1511 = vld [vmem:[%s665 + $0x18] sm:$0xff]
        %v1513 = vsel %vm696, %v1507, 0
        %1515 = vmatpush.msra.mxu0 0.0
        %1516 = vmatpush.msra.mxu0 0.0
        %1517 = vmatpush.msra.mxu0 0.0
        %1518 = vmatpush.msra.mxu0 0.0
        %1519 = vmatpush.msra.mxu0 0.0
        %1520 = vmatpush.msra.mxu0 0.0
        %1521 = vmatpush.msra.mxu0 0.0
        %1522 = vmatpush.msra.mxu0 0.0
        %1523 = vmatpush.msra.mxu0 0.0
        %1524 = vmatpush.msra.mxu0 0.0
        %1525 = vmatpush.msra.mxu0 0.0
        %1526 = vmatpush.msra.mxu0 0.0
        %1527 = vmatpush.msra.mxu0 %v1511
        %1528 = vmatpush.msra.mxu0 %v1510
        %1529 = vmatpush.msra.mxu0 %v1509
        %1530 = vmatpush.msra.mxu0 %v1508
        %1531 = vmatmul.f32.gmra.mxu0 %v1513
        %v1532 = vpop.f32.mrf.mxu0
        %v1533 = vadd.f32 0.0, %v1532
        %1534 = vdwg.mxu0
        %v1535 = vadd.f32 %v692, %v1533
        %v1536 = vld [vmem:[%s668] sm:$0x1]
        %v1537 = vld [vmem:[%s566] sm:$0x1]
        %v1538 = vsel %vm696, %v1535, 0.0
        %1539 = vadd.xlane.f32.xlu0 %v1538
        %v1540 = vpop.xlane.xlu0 %1539
        %v1541 = vmul.f32 %v1540, %v706
        %v1542 = vmul.f32 %v1535, %v1535
        %v1543 = vsel %vm696, %v1542, 0.0
        %1544 = vadd.xlane.f32.xlu0 %v1543
        %v1545 = vpop.xlane.xlu0 %1544
        %v1546 = vmul.f32 %v1545, %v706
        %v1547 = vmul.f32 %v1541, %v1541
        %v1548 = vsub.f32 %v1546, %v1547
        %v1549 = vsub.f32 %v1535, %v1541
        %v1550 = vadd.f32 %v1548, 1e-05
        %v1551 = vrsqrt.pop %v1550
        %v1552 = vmul.f32 %v1551, %v1550
        %v1553 = vmul.f32 %v1552, %v1551
        %v1554 = vmul.f32 0.5, %v1553
        %v1555 = vsub.f32 1.5, %v1554
        %v1556 = vmul.f32 %v1551, %v1555
        %vm1557 = vweird.f32 %v1550
        %vm1558 = vweird.f32 %v1551
        %vm1559 = vmor %vm1557, %vm1558
        %v1560 = vsel %vm1559, %v1551, %v1556
        %v1561 = vmul.f32 %v1549, %v1560
        %v1563 = vperm.slane %v1536, 0
        %v1565 = vmul.f32 %v1561, %v1563
        %v1567 = vperm.slane %v1537, 0
        %v1569 = vadd.f32 %v1565, %v1567
        %v1570 = vld [vmem:[%s673] sm:$0xff]
        %v1571 = vld [vmem:[%s673 + $0x8] sm:$0xff]
        %v1572 = vld [vmem:[%s673 + $0x10] sm:$0xff]
        %v1573 = vld [vmem:[%s673 + $0x18] sm:$0xff]
        %v1574 = vld [vmem:[%s676] sm:$0x1]
        %v1576 = vperm.slane %v1574, 0
        %v1579 = vsel %vm696, %v1569, 0
        %1581 = vmatpush.msra.mxu0 0.0
        %1582 = vmatpush.msra.mxu0 0.0
        %1583 = vmatpush.msra.mxu0 0.0
        %1584 = vmatpush.msra.mxu0 0.0
        %1585 = vmatpush.msra.mxu0 0.0
        %1586 = vmatpush.msra.mxu0 0.0
        %1587 = vmatpush.msra.mxu0 0.0
        %1588 = vmatpush.msra.mxu0 0.0
        %1589 = vmatpush.msra.mxu0 0.0
        %1590 = vmatpush.msra.mxu0 0.0
        %1591 = vmatpush.msra.mxu0 0.0
        %1592 = vmatpush.msra.mxu0 0.0
        %1593 = vmatpush.msra.mxu0 %v1573
        %1594 = vmatpush.msra.mxu0 %v1572
        %1595 = vmatpush.msra.mxu0 %v1571
        %1596 = vmatpush.msra.mxu0 %v1570
        %1597 = vmatmul.f32.gmra.mxu0 %v1579
        %v1598 = vpop.f32.mrf.mxu0
        %v1599 = vadd.f32 %v1576, %v1598
        %1600 = vdwg.mxu0
        %v1601 = vmul.f32 %v1599, 0.5
        %v1602 = vmul.f32 %v1599, 0.70710677
        %v1603 = vmul.f32 %v1602, %v1602
        %v1604 = vmin.f32 16.0, %v1603
        %v1605 = vmul.f32 %v1604, 2.1237322e-06
        %v1606 = vadd.f32 %v1605, 0.00028619796
        %v1607 = vmul.f32 %v1604, %v1606
        %v1608 = vadd.f32 %v1607, 0.0036580483
        %v1609 = vmul.f32 %v1604, %v1608
        %v1610 = vadd.f32 %v1609, 0.05243302
        %v1611 = vmul.f32 %v1604, %v1610
        %v1612 = vadd.f32 %v1611, 0.18741608
        %v1613 = vmul.f32 %v1604, %v1612
        %v1614 = vadd.f32 %v1613, 1.1283791
        %v1615 = vmul.f32 %v1602, %v1614
        %v1616 = vmul.f32 %v1604, 3.8918573e-05
        %v1617 = vadd.f32 %v1616, 0.001143296
        %v1618 = vmul.f32 %v1604, %v1617
        %v1619 = vadd.f32 %v1618, 0.014752088
        %v1620 = vmul.f32 %v1604, %v1619
        %v1621 = vadd.f32 %v1620, 0.112945676
        %v1622 = vmul.f32 %v1604, %v1621
        %v1623 = vadd.f32 %v1622, 0.4994258
        %v1624 = vmul.f32 %v1604, %v1623
        %v1625 = vadd.f32 %v1624, 1.0
        %v1626 = vrcp.pop %v1625
        %v1627 = vmul.f32 %v1625, %v1626
        %v1628 = vsub.f32 1.0, %v1627
        %v1629 = vmul.f32 %v1626, %v1628
        %v1630 = vadd.f32 %v1626, %v1629
        %vm1631 = vweird.f32 %v1625
        %vm1632 = vweird.f32 %v1626
        %vm1633 = vmor %vm1631, %vm1632
        %v1634 = vsel %vm1633, %v1626, %v1630
        %v1635 = vand.u32 2147483647, %v1625
        %vm1636 = vcmp.eq.f32.partialorder %v1635, 8.507059e+37
        %v1637 = vand.u32 %v1625, 2147483648
        %v1638 = vor.u32 1.1754944e-38, %v1637
        %v1639 = vsel %vm1636, %v1638, %v1634
        %v1640 = vmul.f32 %v1615, %v1639
        %v1641 = vmin.f32 %v1640, 1.0
        %v1642 = vmax.f32 %v1641, -1.0
        %v1643 = vadd.f32 %v1642, 1.0
        %v1644 = vmul.f32 %v1601, %v1643
        %v1645 = vld [vmem:[%s681] sm:$0xff]
        %v1646 = vld [vmem:[%s681 + $0x8] sm:$0xff]
        %v1647 = vld [vmem:[%s681 + $0x10] sm:$0xff]
        %v1648 = vld [vmem:[%s681 + $0x18] sm:$0xff]
        %v1649 = vld [vmem:[%s681 + $0x20] sm:$0xff]
        %v1650 = vld [vmem:[%s681 + $0x28] sm:$0xff]
        %v1651 = vld [vmem:[%s681 + $0x30] sm:$0xff]
        %v1652 = vld [vmem:[%s681 + $0x38] sm:$0xff]
        %v1653 = vld [vmem:[%s684] sm:$0x1]
        %v1655 = vperm.slane %v1653, 0
        %vm1657 = vcmask 523264
        %v1659 = vsel %vm1657, %v1644, 0
        %1661 = vmatpush.msra.mxu0 0.0
        %1662 = vmatpush.msra.mxu0 0.0
        %1663 = vmatpush.msra.mxu0 0.0
        %1664 = vmatpush.msra.mxu0 0.0
        %1665 = vmatpush.msra.mxu0 0.0
        %1666 = vmatpush.msra.mxu0 0.0
        %1667 = vmatpush.msra.mxu0 0.0
        %1668 = vmatpush.msra.mxu0 0.0
        %1669 = vmatpush.msra.mxu0 %v1652
        %1670 = vmatpush.msra.mxu0 %v1651
        %1671 = vmatpush.msra.mxu0 %v1650
        %1672 = vmatpush.msra.mxu0 %v1649
        %1673 = vmatpush.msra.mxu0 %v1648
        %1674 = vmatpush.msra.mxu0 %v1647
        %1675 = vmatpush.msra.mxu0 %v1646
        %1676 = vmatpush.msra.mxu0 %v1645
        %1677 = vmatmul.f32.gmra.mxu0 %v1659
        %v1678 = vpop.f32.mrf.mxu0
        %v1679 = vadd.f32 %v1655, %v1678
        %1680 = vdwg.mxu0
        %v1681 = vadd.f32 %v1535, %v1679
        %1682 = vst.msk [vmem:[%s652] sm:$0xff] %vm696, %v1681
        %s1683 = sand.u32 %s367, 1
        %s1684 = scalar_lea.sflag [#allocation4], %s1683
        %s1685 = sand.u32 %s367, 1
        %s1686 = smul.addr %s1685, 8
        %s1687 = scalar_lea.vmem [#allocation10], %s1686
        // Predicated region
        $region89: #{tpu_custom_call.1} parent=67 // pred_check
          %p1688 = pneg %p377
        $region90: #{tpu_custom_call.1} parent=67 // pred_check_branch
          %1690 = sbr.rel (%p1688) target = $region92
        $region91: #{tpu_custom_call.1} parent=67 // pred_region
          %1692 = vsyncadd %s1684, 0
          %s1693 = smul.addr %s39, 8
          %s1694 = scalar_lea.hbm %s12, %s1693
          %s1696 = sshll.u32 %s1687, 4
          %s1697 = int_to_ptr.vmem [resolvable:$true] %s1696
          %s1698 = sshll.u32 %s1694, 4
          %s1699 = int_to_ptr.hbm [resolvable:$true] %s1698
          %1701 = dma.vmem_to_hbm [thread:$0]  %s1697, 128, %s1699, %s1684
        $region92: #{tpu_custom_call.1} parent=67 // pred_fallthru
          _
      $region68: #{tpu_custom_call.1} parent=5 // pred_fallthru
        _
      %p1702 = scmp.le.s32.totalorder 2, %s30
      // Predicated region
      $region93: #{tpu_custom_call.1} parent=5 // pred_check
        %p1703 = pneg %p1702
      $region94: #{tpu_custom_call.1} parent=5 // pred_check_branch
        %1705 = sbr.rel (%p1703) target = $region96
      $region95: #{tpu_custom_call.1} parent=5 // pred_region
        %s1706 = ssub.s32 %s30, 2
        // Predicated region
        $region97: #{tpu_custom_call.1} parent=95 // pred_check
          %p1707 = pneg %p383
        $region98: #{tpu_custom_call.1} parent=95 // pred_check_branch
          %1709 = sbr.rel (%p1707) target = $region100
        $region99: #{tpu_custom_call.1} parent=95 // pred_region
          %s1710 = sand.u32 %s368, 1
          %s1711 = scalar_lea.sflag [#allocation4], %s1710
          %s1712 = sand.u32 %s368, 1
          %s1713 = smul.addr %s1712, 8
          %s1714 = scalar_lea.vmem [#allocation10], %s1713
          %1716 = dma.done %s1711, 128
        $region100: #{tpu_custom_call.1} parent=95 // pred_fallthru
          _
      $region96: #{tpu_custom_call.1} parent=5 // pred_fallthru
        _
    $region6: #{tpu_custom_call.1} parent=1 // loop_footer
      %s34 = sadd.s32 1, %s30
    $region7: #{tpu_custom_call.1} parent=1 // loop_footer_branch
      %29 = sbr.rel target = $region3
    $region8: #{tpu_custom_call.1} parent=1 // loop_exit
      _
    %1717 = vsyncpa [#allocation3], 1
    %s1718 = scalar_lea.sflag [#allocation3], 1
    %1719 = vsyncpa %s1718, 1
    %1720 = vsyncpa [#allocation6], 1
    %s1721 = scalar_lea.sflag [#allocation6], 1
    %1722 = vsyncpa %s1721, 1
    %1723 = vsyncpa [#allocation9], 1
    %s1724 = scalar_lea.sflag [#allocation9], 1
    %1725 = vsyncpa %s1724, 1
    %1726 = vsyncpa [#allocation4], 1
    %s1727 = scalar_lea.sflag [#allocation4], 1
    %1728 = vsyncpa %s1727, 1

</llo_original>
